<compile_context>
chip_gen: v7x
topology: tpu7x:2x2x1
jax: 0.10.0
libtpu: 0.0.40
codegen_flags: <defaults>
</compile_context>

<pallas_src>
import jax
import jax.numpy as jnp
from jax.experimental import pallas as pl
from jax.experimental.pallas import tpu as pltpu

# ----------------------------- problem sizes -------------------------------
T          = 8     # sequence length
INPUT_DIM  = 16
HID        = 32
N_LAYERS   = 2
OUT_DIM    = 8
DROPOUT_P  = 0.1   # unused at inference (eval semantics)


# ------------------------------ kernel helpers ------------------------------
def _sigmoid(x):
    # tanh-form sigmoid: keeps all gate transcendentals on the EUP tanh path
    # (no exp + divide); mathematically identical to the logistic sigmoid.
    return 0.5 * (jnp.tanh(0.5 * x) + 1.0)


def _lstm_cell(gates, c_prev):
    """gates: (1, 4*HID) packed [i|f|g|o]; c_prev: (1, HID)."""
    # Whole-vreg activations (2 EUP passes over the 128-lane gate vector),
    # then static 32-lane extracts for the cross-gate combine - the minimal
    # unavoidable lane movement (XLU slot has plenty of slack here).
    sig = _sigmoid(gates)
    th = jnp.tanh(gates)
    i_g = sig[:, 0 * HID:1 * HID]
    f_g = sig[:, 1 * HID:2 * HID]
    g_g = th[:, 2 * HID:3 * HID]
    o_g = sig[:, 3 * HID:4 * HID]
    c_new = f_g * c_prev + i_g * g_g
    h_new = o_g * jnp.tanh(c_new)
    return h_new, c_new


# ------------------------------- kernel ------------------------------------
def decoder_kernel(x_ref, h0_ref, w_ih0_ref, w_hh0_ref, w_cat_ref, b_ref,
                   wfc_ref, bfc_ref,
                   pred_ref, hN_ref, cN_ref,
                   lhs_scr, htop_scr):
    """Single invocation: hoisted input projection, unrolled T-step recurrence
    with vreg-carried state, fused per-layer matmuls, deferred FC."""
    # ---- hoisted layer-0 input projection for all timesteps (1 MXU push) ----
    x_proj = (jnp.dot(x_ref[...], w_ih0_ref[...],
                      preferred_element_type=jnp.float32)
              + b_ref[0:1, :])                                  # (T, 4*HID)

    # Recurrent state lives in vregs (loop-carried values, no VMEM scratch).
    h = [h0_ref[l:l + 1, :] for l in range(N_LAYERS)]           # (1, HID) each
    c = [jnp.zeros((1, HID), jnp.float32) for _ in range(N_LAYERS)]

    for t in range(T):                                          # fully unrolled
        # layer 0: input term precomputed -> a single recurrent matmul
        gates = x_proj[t:t + 1, :] + jnp.dot(
            h[0], w_hh0_ref[...], preferred_element_type=jnp.float32)
        h[0], c[0] = _lstm_cell(gates, c[0])
        x_in = h[0]

        # layers 1..: fused [x_in | h_prev] @ [W_ih ; W_hh] -> one matmul/layer
        for l in range(1, N_LAYERS):
            lhs_scr[:, 0:HID] = x_in
            lhs_scr[:, HID:2 * HID] = h[l]
            gates = (jnp.dot(lhs_scr[...], w_cat_ref[l - 1],
                             preferred_element_type=jnp.float32)
                     + b_ref[l:l + 1, :])
            h[l], c[l] = _lstm_cell(gates, c[l])
            x_in = h[l]

        # Stash top-layer output; FC is deferred to a single matmul at the end.
        htop_scr[t:t + 1, :] = x_in
        # TODO(synk): inter-layer dropout (training mode only) intentionally
        # omitted - PyTorch applies it only when module.training is True.

    # ---- deferred FC: one (T, HID) @ (HID, OUT) push + one block store ------
    pred_ref[...] = (jnp.dot(htop_scr[...], wfc_ref[...],
                             preferred_element_type=jnp.float32)
                     + bfc_ref[...])

    # Final hidden / cell states written exactly once.
    for l in range(N_LAYERS):
        hN_ref[l:l + 1, :] = h[l]
        cN_ref[l:l + 1, :] = c[l]


# ------------------------------- wrapper ------------------------------------
@jax.jit
def decoder_forward(x, h0, w_ih0, w_hh0, w_cat, b, wfc, bfc):
    # No grid: the whole problem (< 100 KB) is resident in VMEM for a single
    # kernel invocation; default BlockSpecs map every array whole into VMEM.
    return pl.pallas_call(
        decoder_kernel,
        out_shape=[
            jax.ShapeDtypeStruct((T, OUT_DIM), jnp.float32),
            jax.ShapeDtypeStruct((N_LAYERS, HID), jnp.float32),
            jax.ShapeDtypeStruct((N_LAYERS, HID), jnp.float32),
        ],
        scratch_shapes=[
            pltpu.VMEM((1, 2 * HID), jnp.float32),   # fused-matmul LHS staging
            pltpu.VMEM((T, HID), jnp.float32),       # top-layer outputs (deferred FC)
        ],
    )(x, h0, w_ih0, w_hh0, w_cat, b, wfc, bfc)


# --------------------------- pure-JAX reference ------------------------------
def decoder_reference(x, h0, w_ih0, w_hh0, w_cat, b, wfc, bfc):
    def cell(gates, c_prev):
        i_g = jax.nn.sigmoid(gates[0 * HID:1 * HID])
        f_g = jax.nn.sigmoid(gates[1 * HID:2 * HID])
        g_g = jnp.tanh(gates[2 * HID:3 * HID])
        o_g = jax.nn.sigmoid(gates[3 * HID:4 * HID])
        c_new = f_g * c_prev + i_g * g_g
        h_new = o_g * jnp.tanh(c_new)
        return h_new, c_new

    h = [h0[l] for l in range(N_LAYERS)]
    c = [jnp.zeros((HID,), jnp.float32) for _ in range(N_LAYERS)]
    preds = []
    for t in range(T):
        gates0 = x[t] @ w_ih0 + h[0] @ w_hh0 + b[0]
        h[0], c[0] = cell(gates0, c[0])
        inp = h[0]
        for l in range(1, N_LAYERS):
            gates = jnp.concatenate([inp, h[l]]) @ w_cat[l - 1] + b[l]
            h[l], c[l] = cell(gates, c[l])
            inp = h[l]
        preds.append(inp @ wfc + bfc[0])
    return jnp.stack(preds), jnp.stack(h), jnp.stack(c)


# --------------------------------- main --------------------------------------
if __name__ == "__main__":
    key = jax.random.PRNGKey(0)
    ks = jax.random.split(key, 10)
    k_scale = 1.0 / jnp.sqrt(HID)  # PyTorch default LSTM/Linear init range

    def unif(k, shape):
        return jax.random.uniform(k, shape, jnp.float32, -k_scale, k_scale)

    # Inputs implied by the forward pass (unbatched LSTM).
    x  = jax.random.normal(ks[0], (T, INPUT_DIM), jnp.float32)
    h0 = jax.random.normal(ks[1], (N_LAYERS, HID), jnp.float32)

    # Parameters (deterministic, synthetic). Stored transposed vs. PyTorch.
    w_ih0 = unif(ks[2], (INPUT_DIM, 4 * HID))                     # layer 0
    w_ihr = unif(ks[3], (N_LAYERS - 1, HID, 4 * HID))             # layers 1..
    w_hh  = unif(ks[4], (N_LAYERS, HID, 4 * HID))
    b_ih  = unif(ks[5], (N_LAYERS, 4 * HID))
    b_hh  = unif(ks[6], (N_LAYERS, 4 * HID))
    b     = b_ih + b_hh
    wfc   = unif(ks[7], (HID, OUT_DIM))
    bfc   = unif(ks[8], (1, OUT_DIM))

    # One-time weight packing for the kernel (outside the hot path):
    w_hh0 = w_hh[0]                                               # (HID, 4*HID)
    w_cat = jnp.concatenate([w_ihr, w_hh[1:]], axis=1)            # (L-1, 2*HID, 4*HID)

    pred, h_n, c_n = decoder_forward(x, h0, w_ih0, w_hh0, w_cat, b, wfc, bfc)
    jax.block_until_ready((pred, h_n, c_n))

    pred_r, h_r, c_r = decoder_reference(x, h0, w_ih0, w_hh0, w_cat, b, wfc, bfc)
    assert pred.shape == (T, OUT_DIM) and h_n.shape == (N_LAYERS, HID)
    assert jnp.allclose(pred, pred_r, atol=1e-4, rtol=1e-4)
    assert jnp.allclose(h_n, h_r, atol=1e-4, rtol=1e-4)
    assert jnp.allclose(c_n, c_r, atol=1e-4, rtol=1e-4)

    print("KERNEL_OK")
</pallas_src>

<mosaic_0001>
module attributes {stable_mosaic.version = 11 : i64} {
  func.func @decoder_kernel(%arg0: memref<8x16xf32, #tpu.memory_space<vmem>>, %arg1: memref<2x32xf32, #tpu.memory_space<vmem>>, %arg2: memref<16x128xf32, #tpu.memory_space<vmem>>, %arg3: memref<32x128xf32, #tpu.memory_space<vmem>>, %arg4: memref<1x64x128xf32, #tpu.memory_space<vmem>>, %arg5: memref<2x128xf32, #tpu.memory_space<vmem>>, %arg6: memref<32x8xf32, #tpu.memory_space<vmem>>, %arg7: memref<1x8xf32, #tpu.memory_space<vmem>>, %arg8: memref<8x8xf32, #tpu.memory_space<vmem>>, %arg9: memref<2x32xf32, #tpu.memory_space<vmem>>, %arg10: memref<2x32xf32, #tpu.memory_space<vmem>>, %arg11: memref<1x64xf32, #tpu.memory_space<vmem>>, %arg12: memref<8x32xf32, #tpu.memory_space<vmem>>) attributes {dimension_semantics = [], scalar_prefetch = 0 : i64, scratch_operands = 2 : i64, tpu.core_type = #tpu.core_type<tc>} {
    %c0 = arith.constant 0 : index
    %c0_0 = arith.constant 0 : index
    %0 = vector.load %arg0[%c0, %c0_0] : memref<8x16xf32, #tpu.memory_space<vmem>>, vector<8x16xf32>
    %c0_1 = arith.constant 0 : index
    %c0_2 = arith.constant 0 : index
    %1 = vector.load %arg2[%c0_1, %c0_2] : memref<16x128xf32, #tpu.memory_space<vmem>>, vector<16x128xf32>
    %cst = arith.constant dense<0.000000e+00> : vector<8x128xf32>
    %2 = tpu.matmul %0, %1, %cst {dimension_numbers = #tpu.dot_dimension_numbers<[1], [0], [0], [1], [0, 0, 1, 1], [], []>} : vector<8x16xf32>, vector<16x128xf32>, vector<8x128xf32> -> vector<8x128xf32>
    %c0_3 = arith.constant 0 : index
    %c0_4 = arith.constant 0 : index
    %3 = vector.load %arg5[%c0_3, %c0_4] : memref<2x128xf32, #tpu.memory_space<vmem>>, vector<1x128xf32>
    %4 = vector.broadcast %3 : vector<1x128xf32> to vector<8x128xf32>
    %5 = arith.addf %2, %4 : vector<8x128xf32>
    %c0_5 = arith.constant 0 : index
    %c0_6 = arith.constant 0 : index
    %6 = vector.load %arg1[%c0_5, %c0_6] : memref<2x32xf32, #tpu.memory_space<vmem>>, vector<1x32xf32>
    %c1 = arith.constant 1 : index
    %c0_7 = arith.constant 0 : index
    %7 = vector.load %arg1[%c1, %c0_7] : memref<2x32xf32, #tpu.memory_space<vmem>>, vector<1x32xf32>
    %cst_8 = arith.constant 0.000000e+00 : f32
    %8 = vector.broadcast %cst_8 : f32 to vector<1x32xf32>
    %cst_9 = arith.constant 0.000000e+00 : f32
    %9 = vector.broadcast %cst_9 : f32 to vector<1x32xf32>
    %10 = vector.extract_strided_slice %5 {offsets = [0, 0], sizes = [1, 128], strides = [1, 1]} : vector<8x128xf32> to vector<1x128xf32>
    %c0_10 = arith.constant 0 : index
    %c0_11 = arith.constant 0 : index
    %11 = vector.load %arg3[%c0_10, %c0_11] : memref<32x128xf32, #tpu.memory_space<vmem>>, vector<32x128xf32>
    %cst_12 = arith.constant dense<0.000000e+00> : vector<1x128xf32>
    %12 = tpu.matmul %6, %11, %cst_12 {dimension_numbers = #tpu.dot_dimension_numbers<[1], [0], [0], [1], [0, 0, 1, 1], [], []>} : vector<1x32xf32>, vector<32x128xf32>, vector<1x128xf32> -> vector<1x128xf32>
    %13 = arith.addf %10, %12 : vector<1x128xf32>
    %cst_13 = arith.constant 5.000000e-01 : f32
    %14 = vector.broadcast %cst_13 : f32 to vector<1x128xf32>
    %15 = arith.mulf %14, %13 : vector<1x128xf32>
    %16 = math.tanh %15 : vector<1x128xf32>
    %cst_14 = arith.constant 1.000000e+00 : f32
    %17 = vector.broadcast %cst_14 : f32 to vector<1x128xf32>
    %18 = arith.addf %16, %17 : vector<1x128xf32>
    %cst_15 = arith.constant 5.000000e-01 : f32
    %19 = vector.broadcast %cst_15 : f32 to vector<1x128xf32>
    %20 = arith.mulf %19, %18 : vector<1x128xf32>
    %21 = math.tanh %13 : vector<1x128xf32>
    %22 = vector.extract_strided_slice %20 {offsets = [0, 0], sizes = [1, 32], strides = [1, 1]} : vector<1x128xf32> to vector<1x32xf32>
    %23 = vector.extract_strided_slice %20 {offsets = [0, 32], sizes = [1, 32], strides = [1, 1]} : vector<1x128xf32> to vector<1x32xf32>
    %24 = vector.extract_strided_slice %21 {offsets = [0, 64], sizes = [1, 32], strides = [1, 1]} : vector<1x128xf32> to vector<1x32xf32>
    %25 = vector.extract_strided_slice %20 {offsets = [0, 96], sizes = [1, 32], strides = [1, 1]} : vector<1x128xf32> to vector<1x32xf32>
    %26 = arith.mulf %23, %8 : vector<1x32xf32>
    %27 = arith.mulf %22, %24 : vector<1x32xf32>
    %28 = arith.addf %26, %27 : vector<1x32xf32>
    %29 = math.tanh %28 : vector<1x32xf32>
    %30 = arith.mulf %25, %29 : vector<1x32xf32>
    %c0_16 = arith.constant 0 : index
    %c0_17 = arith.constant 0 : index
    %31 = vector.load %arg11[%c0_16, %c0_17] : memref<1x64xf32, #tpu.memory_space<vmem>>, vector<1x32xf32>
    tpu.vector_store %arg11[%c0_16, %c0_17], %30 {strides = array<i32>} : memref<1x64xf32, #tpu.memory_space<vmem>>, vector<1x32xf32>,
    %c0_18 = arith.constant 0 : index
    %c32 = arith.constant 32 : index
    %32 = vector.load %arg11[%c0_18, %c32] : memref<1x64xf32, #tpu.memory_space<vmem>>, vector<1x32xf32>
    tpu.vector_store %arg11[%c0_18, %c32], %7 {strides = array<i32>} : memref<1x64xf32, #tpu.memory_space<vmem>>, vector<1x32xf32>,
    %c0_19 = arith.constant 0 : index
    %c0_20 = arith.constant 0 : index
    %33 = vector.load %arg11[%c0_19, %c0_20] : memref<1x64xf32, #tpu.memory_space<vmem>>, vector<1x64xf32>
    %c0_21 = arith.constant 0 : index
    %c0_22 = arith.constant 0 : index
    %c0_23 = arith.constant 0 : index
    %34 = vector.load %arg4[%c0_21, %c0_22, %c0_23] : memref<1x64x128xf32, #tpu.memory_space<vmem>>, vector<1x64x128xf32>
    %35 = vector.shape_cast %34 : vector<1x64x128xf32> to vector<64x128xf32>
    %cst_24 = arith.constant dense<0.000000e+00> : vector<1x128xf32>
    %36 = tpu.matmul %33, %35, %cst_24 {dimension_numbers = #tpu.dot_dimension_numbers<[1], [0], [0], [1], [0, 0, 1, 1], [], []>} : vector<1x64xf32>, vector<64x128xf32>, vector<1x128xf32> -> vector<1x128xf32>
    %c1_25 = arith.constant 1 : index
    %c0_26 = arith.constant 0 : index
    %37 = vector.load %arg5[%c1_25, %c0_26] : memref<2x128xf32, #tpu.memory_space<vmem>>, vector<1x128xf32>
    %38 = arith.addf %36, %37 : vector<1x128xf32>
    %cst_27 = arith.constant 5.000000e-01 : f32
    %39 = vector.broadcast %cst_27 : f32 to vector<1x128xf32>
    %40 = arith.mulf %39, %38 : vector<1x128xf32>
    %41 = math.tanh %40 : vector<1x128xf32>
    %cst_28 = arith.constant 1.000000e+00 : f32
    %42 = vector.broadcast %cst_28 : f32 to vector<1x128xf32>
    %43 = arith.addf %41, %42 : vector<1x128xf32>
    %cst_29 = arith.constant 5.000000e-01 : f32
    %44 = vector.broadcast %cst_29 : f32 to vector<1x128xf32>
    %45 = arith.mulf %44, %43 : vector<1x128xf32>
    %46 = math.tanh %38 : vector<1x128xf32>
    %47 = vector.extract_strided_slice %45 {offsets = [0, 0], sizes = [1, 32], strides = [1, 1]} : vector<1x128xf32> to vector<1x32xf32>
    %48 = vector.extract_strided_slice %45 {offsets = [0, 32], sizes = [1, 32], strides = [1, 1]} : vector<1x128xf32> to vector<1x32xf32>
    %49 = vector.extract_strided_slice %46 {offsets = [0, 64], sizes = [1, 32], strides = [1, 1]} : vector<1x128xf32> to vector<1x32xf32>
    %50 = vector.extract_strided_slice %45 {offsets = [0, 96], sizes = [1, 32], strides = [1, 1]} : vector<1x128xf32> to vector<1x32xf32>
    %51 = arith.mulf %48, %9 : vector<1x32xf32>
    %52 = arith.mulf %47, %49 : vector<1x32xf32>
    %53 = arith.addf %51, %52 : vector<1x32xf32>
    %54 = math.tanh %53 : vector<1x32xf32>
    %55 = arith.mulf %50, %54 : vector<1x32xf32>
    %c0_30 = arith.constant 0 : index
    %c0_31 = arith.constant 0 : index
    %56 = vector.load %arg12[%c0_30, %c0_31] : memref<8x32xf32, #tpu.memory_space<vmem>>, vector<1x32xf32>
    tpu.vector_store %arg12[%c0_30, %c0_31], %55 {strides = array<i32>} : memref<8x32xf32, #tpu.memory_space<vmem>>, vector<1x32xf32>,
    %57 = vector.extract_strided_slice %5 {offsets = [1, 0], sizes = [1, 128], strides = [1, 1]} : vector<8x128xf32> to vector<1x128xf32>
    %c0_32 = arith.constant 0 : index
    %c0_33 = arith.constant 0 : index
    %58 = vector.load %arg3[%c0_32, %c0_33] : memref<32x128xf32, #tpu.memory_space<vmem>>, vector<32x128xf32>
    %cst_34 = arith.constant dense<0.000000e+00> : vector<1x128xf32>
    %59 = tpu.matmul %30, %58, %cst_34 {dimension_numbers = #tpu.dot_dimension_numbers<[1], [0], [0], [1], [0, 0, 1, 1], [], []>} : vector<1x32xf32>, vector<32x128xf32>, vector<1x128xf32> -> vector<1x128xf32>
    %60 = arith.addf %57, %59 : vector<1x128xf32>
    %cst_35 = arith.constant 5.000000e-01 : f32
    %61 = vector.broadcast %cst_35 : f32 to vector<1x128xf32>
    %62 = arith.mulf %61, %60 : vector<1x128xf32>
    %63 = math.tanh %62 : vector<1x128xf32>
    %cst_36 = arith.constant 1.000000e+00 : f32
    %64 = vector.broadcast %cst_36 : f32 to vector<1x128xf32>
    %65 = arith.addf %63, %64 : vector<1x128xf32>
    %cst_37 = arith.constant 5.000000e-01 : f32
    %66 = vector.broadcast %cst_37 : f32 to vector<1x128xf32>
    %67 = arith.mulf %66, %65 : vector<1x128xf32>
    %68 = math.tanh %60 : vector<1x128xf32>
    %69 = vector.extract_strided_slice %67 {offsets = [0, 0], sizes = [1, 32], strides = [1, 1]} : vector<1x128xf32> to vector<1x32xf32>
    %70 = vector.extract_strided_slice %67 {offsets = [0, 32], sizes = [1, 32], strides = [1, 1]} : vector<1x128xf32> to vector<1x32xf32>
    %71 = vector.extract_strided_slice %68 {offsets = [0, 64], sizes = [1, 32], strides = [1, 1]} : vector<1x128xf32> to vector<1x32xf32>
    %72 = vector.extract_strided_slice %67 {offsets = [0, 96], sizes = [1, 32], strides = [1, 1]} : vector<1x128xf32> to vector<1x32xf32>
    %73 = arith.mulf %70, %28 : vector<1x32xf32>
    %74 = arith.mulf %69, %71 : vector<1x32xf32>
    %75 = arith.addf %73, %74 : vector<1x32xf32>
    %76 = math.tanh %75 : vector<1x32xf32>
    %77 = arith.mulf %72, %76 : vector<1x32xf32>
    %c0_38 = arith.constant 0 : index
    %c0_39 = arith.constant 0 : index
    %78 = vector.load %arg11[%c0_38, %c0_39] : memref<1x64xf32, #tpu.memory_space<vmem>>, vector<1x32xf32>
    tpu.vector_store %arg11[%c0_38, %c0_39], %77 {strides = array<i32>} : memref<1x64xf32, #tpu.memory_space<vmem>>, vector<1x32xf32>,
    %c0_40 = arith.constant 0 : index
    %c32_41 = arith.constant 32 : index
    %79 = vector.load %arg11[%c0_40, %c32_41] : memref<1x64xf32, #tpu.memory_space<vmem>>, vector<1x32xf32>
    tpu.vector_store %arg11[%c0_40, %c32_41], %55 {strides = array<i32>} : memref<1x64xf32, #tpu.memory_space<vmem>>, vector<1x32xf32>,
    %c0_42 = arith.constant 0 : index
    %c0_43 = arith.constant 0 : index
    %80 = vector.load %arg11[%c0_42, %c0_43] : memref<1x64xf32, #tpu.memory_space<vmem>>, vector<1x64xf32>
    %c0_44 = arith.constant 0 : index
    %c0_45 = arith.constant 0 : index
    %c0_46 = arith.constant 0 : index
    %81 = vector.load %arg4[%c0_44, %c0_45, %c0_46] : memref<1x64x128xf32, #tpu.memory_space<vmem>>, vector<1x64x128xf32>
    %82 = vector.shape_cast %81 : vector<1x64x128xf32> to vector<64x128xf32>
    %cst_47 = arith.constant dense<0.000000e+00> : vector<1x128xf32>
    %83 = tpu.matmul %80, %82, %cst_47 {dimension_numbers = #tpu.dot_dimension_numbers<[1], [0], [0], [1], [0, 0, 1, 1], [], []>} : vector<1x64xf32>, vector<64x128xf32>, vector<1x128xf32> -> vector<1x128xf32>
    %c1_48 = arith.constant 1 : index
    %c0_49 = arith.constant 0 : index
    %84 = vector.load %arg5[%c1_48, %c0_49] : memref<2x128xf32, #tpu.memory_space<vmem>>, vector<1x128xf32>
    %85 = arith.addf %83, %84 : vector<1x128xf32>
    %cst_50 = arith.constant 5.000000e-01 : f32
    %86 = vector.broadcast %cst_50 : f32 to vector<1x128xf32>
    %87 = arith.mulf %86, %85 : vector<1x128xf32>
    %88 = math.tanh %87 : vector<1x128xf32>
    %cst_51 = arith.constant 1.000000e+00 : f32
    %89 = vector.broadcast %cst_51 : f32 to vector<1x128xf32>
    %90 = arith.addf %88, %89 : vector<1x128xf32>
    %cst_52 = arith.constant 5.000000e-01 : f32
    %91 = vector.broadcast %cst_52 : f32 to vector<1x128xf32>
    %92 = arith.mulf %91, %90 : vector<1x128xf32>
    %93 = math.tanh %85 : vector<1x128xf32>
    %94 = vector.extract_strided_slice %92 {offsets = [0, 0], sizes = [1, 32], strides = [1, 1]} : vector<1x128xf32> to vector<1x32xf32>
    %95 = vector.extract_strided_slice %92 {offsets = [0, 32], sizes = [1, 32], strides = [1, 1]} : vector<1x128xf32> to vector<1x32xf32>
    %96 = vector.extract_strided_slice %93 {offsets = [0, 64], sizes = [1, 32], strides = [1, 1]} : vector<1x128xf32> to vector<1x32xf32>
    %97 = vector.extract_strided_slice %92 {offsets = [0, 96], sizes = [1, 32], strides = [1, 1]} : vector<1x128xf32> to vector<1x32xf32>
    %98 = arith.mulf %95, %53 : vector<1x32xf32>
    %99 = arith.mulf %94, %96 : vector<1x32xf32>
    %100 = arith.addf %98, %99 : vector<1x32xf32>
    %101 = math.tanh %100 : vector<1x32xf32>
    %102 = arith.mulf %97, %101 : vector<1x32xf32>
    %c1_53 = arith.constant 1 : index
    %c0_54 = arith.constant 0 : index
    %103 = vector.load %arg12[%c1_53, %c0_54] : memref<8x32xf32, #tpu.memory_space<vmem>>, vector<1x32xf32>
    tpu.vector_store %arg12[%c1_53, %c0_54], %102 {strides = array<i32>} : memref<8x32xf32, #tpu.memory_space<vmem>>, vector<1x32xf32>,
    %104 = vector.extract_strided_slice %5 {offsets = [2, 0], sizes = [1, 128], strides = [1, 1]} : vector<8x128xf32> to vector<1x128xf32>
    %c0_55 = arith.constant 0 : index
    %c0_56 = arith.constant 0 : index
    %105 = vector.load %arg3[%c0_55, %c0_56] : memref<32x128xf32, #tpu.memory_space<vmem>>, vector<32x128xf32>
    %cst_57 = arith.constant dense<0.000000e+00> : vector<1x128xf32>
    %106 = tpu.matmul %77, %105, %cst_57 {dimension_numbers = #tpu.dot_dimension_numbers<[1], [0], [0], [1], [0, 0, 1, 1], [], []>} : vector<1x32xf32>, vector<32x128xf32>, vector<1x128xf32> -> vector<1x128xf32>
    %107 = arith.addf %104, %106 : vector<1x128xf32>
    %cst_58 = arith.constant 5.000000e-01 : f32
    %108 = vector.broadcast %cst_58 : f32 to vector<1x128xf32>
    %109 = arith.mulf %108, %107 : vector<1x128xf32>
    %110 = math.tanh %109 : vector<1x128xf32>
    %cst_59 = arith.constant 1.000000e+00 : f32
    %111 = vector.broadcast %cst_59 : f32 to vector<1x128xf32>
    %112 = arith.addf %110, %111 : vector<1x128xf32>
    %cst_60 = arith.constant 5.000000e-01 : f32
    %113 = vector.broadcast %cst_60 : f32 to vector<1x128xf32>
    %114 = arith.mulf %113, %112 : vector<1x128xf32>
    %115 = math.tanh %107 : vector<1x128xf32>
    %116 = vector.extract_strided_slice %114 {offsets = [0, 0], sizes = [1, 32], strides = [1, 1]} : vector<1x128xf32> to vector<1x32xf32>
    %117 = vector.extract_strided_slice %114 {offsets = [0, 32], sizes = [1, 32], strides = [1, 1]} : vector<1x128xf32> to vector<1x32xf32>
    %118 = vector.extract_strided_slice %115 {offsets = [0, 64], sizes = [1, 32], strides = [1, 1]} : vector<1x128xf32> to vector<1x32xf32>
    %119 = vector.extract_strided_slice %114 {offsets = [0, 96], sizes = [1, 32], strides = [1, 1]} : vector<1x128xf32> to vector<1x32xf32>
    %120 = arith.mulf %117, %75 : vector<1x32xf32>
    %121 = arith.mulf %116, %118 : vector<1x32xf32>
    %122 = arith.addf %120, %121 : vector<1x32xf32>
    %123 = math.tanh %122 : vector<1x32xf32>
    %124 = arith.mulf %119, %123 : vector<1x32xf32>
    %c0_61 = arith.constant 0 : index
    %c0_62 = arith.constant 0 : index
    %125 = vector.load %arg11[%c0_61, %c0_62] : memref<1x64xf32, #tpu.memory_space<vmem>>, vector<1x32xf32>
    tpu.vector_store %arg11[%c0_61, %c0_62], %124 {strides = array<i32>} : memref<1x64xf32, #tpu.memory_space<vmem>>, vector<1x32xf32>,
    %c0_63 = arith.constant 0 : index
    %c32_64 = arith.constant 32 : index
    %126 = vector.load %arg11[%c0_63, %c32_64] : memref<1x64xf32, #tpu.memory_space<vmem>>, vector<1x32xf32>
    tpu.vector_store %arg11[%c0_63, %c32_64], %102 {strides = array<i32>} : memref<1x64xf32, #tpu.memory_space<vmem>>, vector<1x32xf32>,
    %c0_65 = arith.constant 0 : index
    %c0_66 = arith.constant 0 : index
    %127 = vector.load %arg11[%c0_65, %c0_66] : memref<1x64xf32, #tpu.memory_space<vmem>>, vector<1x64xf32>
    %c0_67 = arith.constant 0 : index
    %c0_68 = arith.constant 0 : index
    %c0_69 = arith.constant 0 : index
    %128 = vector.load %arg4[%c0_67, %c0_68, %c0_69] : memref<1x64x128xf32, #tpu.memory_space<vmem>>, vector<1x64x128xf32>
    %129 = vector.shape_cast %128 : vector<1x64x128xf32> to vector<64x128xf32>
    %cst_70 = arith.constant dense<0.000000e+00> : vector<1x128xf32>
    %130 = tpu.matmul %127, %129, %cst_70 {dimension_numbers = #tpu.dot_dimension_numbers<[1], [0], [0], [1], [0, 0, 1, 1], [], []>} : vector<1x64xf32>, vector<64x128xf32>, vector<1x128xf32> -> vector<1x128xf32>
    %c1_71 = arith.constant 1 : index
    %c0_72 = arith.constant 0 : index
    %131 = vector.load %arg5[%c1_71, %c0_72] : memref<2x128xf32, #tpu.memory_space<vmem>>, vector<1x128xf32>
    %132 = arith.addf %130, %131 : vector<1x128xf32>
    %cst_73 = arith.constant 5.000000e-01 : f32
    %133 = vector.broadcast %cst_73 : f32 to vector<1x128xf32>
    %134 = arith.mulf %133, %132 : vector<1x128xf32>
    %135 = math.tanh %134 : vector<1x128xf32>
    %cst_74 = arith.constant 1.000000e+00 : f32
    %136 = vector.broadcast %cst_74 : f32 to vector<1x128xf32>
    %137 = arith.addf %135, %136 : vector<1x128xf32>
    %cst_75 = arith.constant 5.000000e-01 : f32
    %138 = vector.broadcast %cst_75 : f32 to vector<1x128xf32>
    %139 = arith.mulf %138, %137 : vector<1x128xf32>
    %140 = math.tanh %132 : vector<1x128xf32>
    %141 = vector.extract_strided_slice %139 {offsets = [0, 0], sizes = [1, 32], strides = [1, 1]} : vector<1x128xf32> to vector<1x32xf32>
    %142 = vector.extract_strided_slice %139 {offsets = [0, 32], sizes = [1, 32], strides = [1, 1]} : vector<1x128xf32> to vector<1x32xf32>
    %143 = vector.extract_strided_slice %140 {offsets = [0, 64], sizes = [1, 32], strides = [1, 1]} : vector<1x128xf32> to vector<1x32xf32>
    %144 = vector.extract_strided_slice %139 {offsets = [0, 96], sizes = [1, 32], strides = [1, 1]} : vector<1x128xf32> to vector<1x32xf32>
    %145 = arith.mulf %142, %100 : vector<1x32xf32>
    %146 = arith.mulf %141, %143 : vector<1x32xf32>
    %147 = arith.addf %145, %146 : vector<1x32xf32>
    %148 = math.tanh %147 : vector<1x32xf32>
    %149 = arith.mulf %144, %148 : vector<1x32xf32>
    %c2 = arith.constant 2 : index
    %c0_76 = arith.constant 0 : index
    %150 = vector.load %arg12[%c2, %c0_76] : memref<8x32xf32, #tpu.memory_space<vmem>>, vector<1x32xf32>
    tpu.vector_store %arg12[%c2, %c0_76], %149 {strides = array<i32>} : memref<8x32xf32, #tpu.memory_space<vmem>>, vector<1x32xf32>,
    %151 = vector.extract_strided_slice %5 {offsets = [3, 0], sizes = [1, 128], strides = [1, 1]} : vector<8x128xf32> to vector<1x128xf32>
    %c0_77 = arith.constant 0 : index
    %c0_78 = arith.constant 0 : index
    %152 = vector.load %arg3[%c0_77, %c0_78] : memref<32x128xf32, #tpu.memory_space<vmem>>, vector<32x128xf32>
    %cst_79 = arith.constant dense<0.000000e+00> : vector<1x128xf32>
    %153 = tpu.matmul %124, %152, %cst_79 {dimension_numbers = #tpu.dot_dimension_numbers<[1], [0], [0], [1], [0, 0, 1, 1], [], []>} : vector<1x32xf32>, vector<32x128xf32>, vector<1x128xf32> -> vector<1x128xf32>
    %154 = arith.addf %151, %153 : vector<1x128xf32>
    %cst_80 = arith.constant 5.000000e-01 : f32
    %155 = vector.broadcast %cst_80 : f32 to vector<1x128xf32>
    %156 = arith.mulf %155, %154 : vector<1x128xf32>
    %157 = math.tanh %156 : vector<1x128xf32>
    %cst_81 = arith.constant 1.000000e+00 : f32
    %158 = vector.broadcast %cst_81 : f32 to vector<1x128xf32>
    %159 = arith.addf %157, %158 : vector<1x128xf32>
    %cst_82 = arith.constant 5.000000e-01 : f32
    %160 = vector.broadcast %cst_82 : f32 to vector<1x128xf32>
    %161 = arith.mulf %160, %159 : vector<1x128xf32>
    %162 = math.tanh %154 : vector<1x128xf32>
    %163 = vector.extract_strided_slice %161 {offsets = [0, 0], sizes = [1, 32], strides = [1, 1]} : vector<1x128xf32> to vector<1x32xf32>
    %164 = vector.extract_strided_slice %161 {offsets = [0, 32], sizes = [1, 32], strides = [1, 1]} : vector<1x128xf32> to vector<1x32xf32>
    %165 = vector.extract_strided_slice %162 {offsets = [0, 64], sizes = [1, 32], strides = [1, 1]} : vector<1x128xf32> to vector<1x32xf32>
    %166 = vector.extract_strided_slice %161 {offsets = [0, 96], sizes = [1, 32], strides = [1, 1]} : vector<1x128xf32> to vector<1x32xf32>
    %167 = arith.mulf %164, %122 : vector<1x32xf32>
    %168 = arith.mulf %163, %165 : vector<1x32xf32>
    %169 = arith.addf %167, %168 : vector<1x32xf32>
    %170 = math.tanh %169 : vector<1x32xf32>
    %171 = arith.mulf %166, %170 : vector<1x32xf32>
    %c0_83 = arith.constant 0 : index
    %c0_84 = arith.constant 0 : index
    %172 = vector.load %arg11[%c0_83, %c0_84] : memref<1x64xf32, #tpu.memory_space<vmem>>, vector<1x32xf32>
    tpu.vector_store %arg11[%c0_83, %c0_84], %171 {strides = array<i32>} : memref<1x64xf32, #tpu.memory_space<vmem>>, vector<1x32xf32>,
    %c0_85 = arith.constant 0 : index
    %c32_86 = arith.constant 32 : index
    %173 = vector.load %arg11[%c0_85, %c32_86] : memref<1x64xf32, #tpu.memory_space<vmem>>, vector<1x32xf32>
    tpu.vector_store %arg11[%c0_85, %c32_86], %149 {strides = array<i32>} : memref<1x64xf32, #tpu.memory_space<vmem>>, vector<1x32xf32>,
    %c0_87 = arith.constant 0 : index
    %c0_88 = arith.constant 0 : index
    %174 = vector.load %arg11[%c0_87, %c0_88] : memref<1x64xf32, #tpu.memory_space<vmem>>, vector<1x64xf32>
    %c0_89 = arith.constant 0 : index
    %c0_90 = arith.constant 0 : index
    %c0_91 = arith.constant 0 : index
    %175 = vector.load %arg4[%c0_89, %c0_90, %c0_91] : memref<1x64x128xf32, #tpu.memory_space<vmem>>, vector<1x64x128xf32>
    %176 = vector.shape_cast %175 : vector<1x64x128xf32> to vector<64x128xf32>
    %cst_92 = arith.constant dense<0.000000e+00> : vector<1x128xf32>
    %177 = tpu.matmul %174, %176, %cst_92 {dimension_numbers = #tpu.dot_dimension_numbers<[1], [0], [0], [1], [0, 0, 1, 1], [], []>} : vector<1x64xf32>, vector<64x128xf32>, vector<1x128xf32> -> vector<1x128xf32>
    %c1_93 = arith.constant 1 : index
    %c0_94 = arith.constant 0 : index
    %178 = vector.load %arg5[%c1_93, %c0_94] : memref<2x128xf32, #tpu.memory_space<vmem>>, vector<1x128xf32>
    %179 = arith.addf %177, %178 : vector<1x128xf32>
    %cst_95 = arith.constant 5.000000e-01 : f32
    %180 = vector.broadcast %cst_95 : f32 to vector<1x128xf32>
    %181 = arith.mulf %180, %179 : vector<1x128xf32>
    %182 = math.tanh %181 : vector<1x128xf32>
    %cst_96 = arith.constant 1.000000e+00 : f32
    %183 = vector.broadcast %cst_96 : f32 to vector<1x128xf32>
    %184 = arith.addf %182, %183 : vector<1x128xf32>
    %cst_97 = arith.constant 5.000000e-01 : f32
    %185 = vector.broadcast %cst_97 : f32 to vector<1x128xf32>
    %186 = arith.mulf %185, %184 : vector<1x128xf32>
    %187 = math.tanh %179 : vector<1x128xf32>
    %188 = vector.extract_strided_slice %186 {offsets = [0, 0], sizes = [1, 32], strides = [1, 1]} : vector<1x128xf32> to vector<1x32xf32>
    %189 = vector.extract_strided_slice %186 {offsets = [0, 32], sizes = [1, 32], strides = [1, 1]} : vector<1x128xf32> to vector<1x32xf32>
    %190 = vector.extract_strided_slice %187 {offsets = [0, 64], sizes = [1, 32], strides = [1, 1]} : vector<1x128xf32> to vector<1x32xf32>
    %191 = vector.extract_strided_slice %186 {offsets = [0, 96], sizes = [1, 32], strides = [1, 1]} : vector<1x128xf32> to vector<1x32xf32>
    %192 = arith.mulf %189, %147 : vector<1x32xf32>
    %193 = arith.mulf %188, %190 : vector<1x32xf32>
    %194 = arith.addf %192, %193 : vector<1x32xf32>
    %195 = math.tanh %194 : vector<1x32xf32>
    %196 = arith.mulf %191, %195 : vector<1x32xf32>
    %c3 = arith.constant 3 : index
    %c0_98 = arith.constant 0 : index
    %197 = vector.load %arg12[%c3, %c0_98] : memref<8x32xf32, #tpu.memory_space<vmem>>, vector<1x32xf32>
    tpu.vector_store %arg12[%c3, %c0_98], %196 {strides = array<i32>} : memref<8x32xf32, #tpu.memory_space<vmem>>, vector<1x32xf32>,
    %198 = vector.extract_strided_slice %5 {offsets = [4, 0], sizes = [1, 128], strides = [1, 1]} : vector<8x128xf32> to vector<1x128xf32>
    %c0_99 = arith.constant 0 : index
    %c0_100 = arith.constant 0 : index
    %199 = vector.load %arg3[%c0_99, %c0_100] : memref<32x128xf32, #tpu.memory_space<vmem>>, vector<32x128xf32>
    %cst_101 = arith.constant dense<0.000000e+00> : vector<1x128xf32>
    %200 = tpu.matmul %171, %199, %cst_101 {dimension_numbers = #tpu.dot_dimension_numbers<[1], [0], [0], [1], [0, 0, 1, 1], [], []>} : vector<1x32xf32>, vector<32x128xf32>, vector<1x128xf32> -> vector<1x128xf32>
    %201 = arith.addf %198, %200 : vector<1x128xf32>
    %cst_102 = arith.constant 5.000000e-01 : f32
    %202 = vector.broadcast %cst_102 : f32 to vector<1x128xf32>
    %203 = arith.mulf %202, %201 : vector<1x128xf32>
    %204 = math.tanh %203 : vector<1x128xf32>
    %cst_103 = arith.constant 1.000000e+00 : f32
    %205 = vector.broadcast %cst_103 : f32 to vector<1x128xf32>
    %206 = arith.addf %204, %205 : vector<1x128xf32>
    %cst_104 = arith.constant 5.000000e-01 : f32
    %207 = vector.broadcast %cst_104 : f32 to vector<1x128xf32>
    %208 = arith.mulf %207, %206 : vector<1x128xf32>
    %209 = math.tanh %201 : vector<1x128xf32>
    %210 = vector.extract_strided_slice %208 {offsets = [0, 0], sizes = [1, 32], strides = [1, 1]} : vector<1x128xf32> to vector<1x32xf32>
    %211 = vector.extract_strided_slice %208 {offsets = [0, 32], sizes = [1, 32], strides = [1, 1]} : vector<1x128xf32> to vector<1x32xf32>
    %212 = vector.extract_strided_slice %209 {offsets = [0, 64], sizes = [1, 32], strides = [1, 1]} : vector<1x128xf32> to vector<1x32xf32>
    %213 = vector.extract_strided_slice %208 {offsets = [0, 96], sizes = [1, 32], strides = [1, 1]} : vector<1x128xf32> to vector<1x32xf32>
    %214 = arith.mulf %211, %169 : vector<1x32xf32>
    %215 = arith.mulf %210, %212 : vector<1x32xf32>
    %216 = arith.addf %214, %215 : vector<1x32xf32>
    %217 = math.tanh %216 : vector<1x32xf32>
    %218 = arith.mulf %213, %217 : vector<1x32xf32>
    %c0_105 = arith.constant 0 : index
    %c0_106 = arith.constant 0 : index
    %219 = vector.load %arg11[%c0_105, %c0_106] : memref<1x64xf32, #tpu.memory_space<vmem>>, vector<1x32xf32>
    tpu.vector_store %arg11[%c0_105, %c0_106], %218 {strides = array<i32>} : memref<1x64xf32, #tpu.memory_space<vmem>>, vector<1x32xf32>,
    %c0_107 = arith.constant 0 : index
    %c32_108 = arith.constant 32 : index
    %220 = vector.load %arg11[%c0_107, %c32_108] : memref<1x64xf32, #tpu.memory_space<vmem>>, vector<1x32xf32>
    tpu.vector_store %arg11[%c0_107, %c32_108], %196 {strides = array<i32>} : memref<1x64xf32, #tpu.memory_space<vmem>>, vector<1x32xf32>,
    %c0_109 = arith.constant 0 : index
    %c0_110 = arith.constant 0 : index
    %221 = vector.load %arg11[%c0_109, %c0_110] : memref<1x64xf32, #tpu.memory_space<vmem>>, vector<1x64xf32>
    %c0_111 = arith.constant 0 : index
    %c0_112 = arith.constant 0 : index
    %c0_113 = arith.constant 0 : index
    %222 = vector.load %arg4[%c0_111, %c0_112, %c0_113] : memref<1x64x128xf32, #tpu.memory_space<vmem>>, vector<1x64x128xf32>
    %223 = vector.shape_cast %222 : vector<1x64x128xf32> to vector<64x128xf32>
    %cst_114 = arith.constant dense<0.000000e+00> : vector<1x128xf32>
    %224 = tpu.matmul %221, %223, %cst_114 {dimension_numbers = #tpu.dot_dimension_numbers<[1], [0], [0], [1], [0, 0, 1, 1], [], []>} : vector<1x64xf32>, vector<64x128xf32>, vector<1x128xf32> -> vector<1x128xf32>
    %c1_115 = arith.constant 1 : index
    %c0_116 = arith.constant 0 : index
    %225 = vector.load %arg5[%c1_115, %c0_116] : memref<2x128xf32, #tpu.memory_space<vmem>>, vector<1x128xf32>
    %226 = arith.addf %224, %225 : vector<1x128xf32>
    %cst_117 = arith.constant 5.000000e-01 : f32
    %227 = vector.broadcast %cst_117 : f32 to vector<1x128xf32>
    %228 = arith.mulf %227, %226 : vector<1x128xf32>
    %229 = math.tanh %228 : vector<1x128xf32>
    %cst_118 = arith.constant 1.000000e+00 : f32
    %230 = vector.broadcast %cst_118 : f32 to vector<1x128xf32>
    %231 = arith.addf %229, %230 : vector<1x128xf32>
    %cst_119 = arith.constant 5.000000e-01 : f32
    %232 = vector.broadcast %cst_119 : f32 to vector<1x128xf32>
    %233 = arith.mulf %232, %231 : vector<1x128xf32>
    %234 = math.tanh %226 : vector<1x128xf32>
    %235 = vector.extract_strided_slice %233 {offsets = [0, 0], sizes = [1, 32], strides = [1, 1]} : vector<1x128xf32> to vector<1x32xf32>
    %236 = vector.extract_strided_slice %233 {offsets = [0, 32], sizes = [1, 32], strides = [1, 1]} : vector<1x128xf32> to vector<1x32xf32>
    %237 = vector.extract_strided_slice %234 {offsets = [0, 64], sizes = [1, 32], strides = [1, 1]} : vector<1x128xf32> to vector<1x32xf32>
    %238 = vector.extract_strided_slice %233 {offsets = [0, 96], sizes = [1, 32], strides = [1, 1]} : vector<1x128xf32> to vector<1x32xf32>
    %239 = arith.mulf %236, %194 : vector<1x32xf32>
    %240 = arith.mulf %235, %237 : vector<1x32xf32>
    %241 = arith.addf %239, %240 : vector<1x32xf32>
    %242 = math.tanh %241 : vector<1x32xf32>
    %243 = arith.mulf %238, %242 : vector<1x32xf32>
    %c4 = arith.constant 4 : index
    %c0_120 = arith.constant 0 : index
    %244 = vector.load %arg12[%c4, %c0_120] : memref<8x32xf32, #tpu.memory_space<vmem>>, vector<1x32xf32>
    tpu.vector_store %arg12[%c4, %c0_120], %243 {strides = array<i32>} : memref<8x32xf32, #tpu.memory_space<vmem>>, vector<1x32xf32>,
    %245 = vector.extract_strided_slice %5 {offsets = [5, 0], sizes = [1, 128], strides = [1, 1]} : vector<8x128xf32> to vector<1x128xf32>
    %c0_121 = arith.constant 0 : index
    %c0_122 = arith.constant 0 : index
    %246 = vector.load %arg3[%c0_121, %c0_122] : memref<32x128xf32, #tpu.memory_space<vmem>>, vector<32x128xf32>
    %cst_123 = arith.constant dense<0.000000e+00> : vector<1x128xf32>
    %247 = tpu.matmul %218, %246, %cst_123 {dimension_numbers = #tpu.dot_dimension_numbers<[1], [0], [0], [1], [0, 0, 1, 1], [], []>} : vector<1x32xf32>, vector<32x128xf32>, vector<1x128xf32> -> vector<1x128xf32>
    %248 = arith.addf %245, %247 : vector<1x128xf32>
    %cst_124 = arith.constant 5.000000e-01 : f32
    %249 = vector.broadcast %cst_124 : f32 to vector<1x128xf32>
    %250 = arith.mulf %249, %248 : vector<1x128xf32>
    %251 = math.tanh %250 : vector<1x128xf32>
    %cst_125 = arith.constant 1.000000e+00 : f32
    %252 = vector.broadcast %cst_125 : f32 to vector<1x128xf32>
    %253 = arith.addf %251, %252 : vector<1x128xf32>
    %cst_126 = arith.constant 5.000000e-01 : f32
    %254 = vector.broadcast %cst_126 : f32 to vector<1x128xf32>
    %255 = arith.mulf %254, %253 : vector<1x128xf32>
    %256 = math.tanh %248 : vector<1x128xf32>
    %257 = vector.extract_strided_slice %255 {offsets = [0, 0], sizes = [1, 32], strides = [1, 1]} : vector<1x128xf32> to vector<1x32xf32>
    %258 = vector.extract_strided_slice %255 {offsets = [0, 32], sizes = [1, 32], strides = [1, 1]} : vector<1x128xf32> to vector<1x32xf32>
    %259 = vector.extract_strided_slice %256 {offsets = [0, 64], sizes = [1, 32], strides = [1, 1]} : vector<1x128xf32> to vector<1x32xf32>
    %260 = vector.extract_strided_slice %255 {offsets = [0, 96], sizes = [1, 32], strides = [1, 1]} : vector<1x128xf32> to vector<1x32xf32>
    %261 = arith.mulf %258, %216 : vector<1x32xf32>
    %262 = arith.mulf %257, %259 : vector<1x32xf32>
    %263 = arith.addf %261, %262 : vector<1x32xf32>
    %264 = math.tanh %263 : vector<1x32xf32>
    %265 = arith.mulf %260, %264 : vector<1x32xf32>
    %c0_127 = arith.constant 0 : index
    %c0_128 = arith.constant 0 : index
    %266 = vector.load %arg11[%c0_127, %c0_128] : memref<1x64xf32, #tpu.memory_space<vmem>>, vector<1x32xf32>
    tpu.vector_store %arg11[%c0_127, %c0_128], %265 {strides = array<i32>} : memref<1x64xf32, #tpu.memory_space<vmem>>, vector<1x32xf32>,
    %c0_129 = arith.constant 0 : index
    %c32_130 = arith.constant 32 : index
    %267 = vector.load %arg11[%c0_129, %c32_130] : memref<1x64xf32, #tpu.memory_space<vmem>>, vector<1x32xf32>
    tpu.vector_store %arg11[%c0_129, %c32_130], %243 {strides = array<i32>} : memref<1x64xf32, #tpu.memory_space<vmem>>, vector<1x32xf32>,
    %c0_131 = arith.constant 0 : index
    %c0_132 = arith.constant 0 : index
    %268 = vector.load %arg11[%c0_131, %c0_132] : memref<1x64xf32, #tpu.memory_space<vmem>>, vector<1x64xf32>
    %c0_133 = arith.constant 0 : index
    %c0_134 = arith.constant 0 : index
    %c0_135 = arith.constant 0 : index
    %269 = vector.load %arg4[%c0_133, %c0_134, %c0_135] : memref<1x64x128xf32, #tpu.memory_space<vmem>>, vector<1x64x128xf32>
    %270 = vector.shape_cast %269 : vector<1x64x128xf32> to vector<64x128xf32>
    %cst_136 = arith.constant dense<0.000000e+00> : vector<1x128xf32>
    %271 = tpu.matmul %268, %270, %cst_136 {dimension_numbers = #tpu.dot_dimension_numbers<[1], [0], [0], [1], [0, 0, 1, 1], [], []>} : vector<1x64xf32>, vector<64x128xf32>, vector<1x128xf32> -> vector<1x128xf32>
    %c1_137 = arith.constant 1 : index
    %c0_138 = arith.constant 0 : index
    %272 = vector.load %arg5[%c1_137, %c0_138] : memref<2x128xf32, #tpu.memory_space<vmem>>, vector<1x128xf32>
    %273 = arith.addf %271, %272 : vector<1x128xf32>
    %cst_139 = arith.constant 5.000000e-01 : f32
    %274 = vector.broadcast %cst_139 : f32 to vector<1x128xf32>
    %275 = arith.mulf %274, %273 : vector<1x128xf32>
    %276 = math.tanh %275 : vector<1x128xf32>
    %cst_140 = arith.constant 1.000000e+00 : f32
    %277 = vector.broadcast %cst_140 : f32 to vector<1x128xf32>
    %278 = arith.addf %276, %277 : vector<1x128xf32>
    %cst_141 = arith.constant 5.000000e-01 : f32
    %279 = vector.broadcast %cst_141 : f32 to vector<1x128xf32>
    %280 = arith.mulf %279, %278 : vector<1x128xf32>
    %281 = math.tanh %273 : vector<1x128xf32>
    %282 = vector.extract_strided_slice %280 {offsets = [0, 0], sizes = [1, 32], strides = [1, 1]} : vector<1x128xf32> to vector<1x32xf32>
    %283 = vector.extract_strided_slice %280 {offsets = [0, 32], sizes = [1, 32], strides = [1, 1]} : vector<1x128xf32> to vector<1x32xf32>
    %284 = vector.extract_strided_slice %281 {offsets = [0, 64], sizes = [1, 32], strides = [1, 1]} : vector<1x128xf32> to vector<1x32xf32>
    %285 = vector.extract_strided_slice %280 {offsets = [0, 96], sizes = [1, 32], strides = [1, 1]} : vector<1x128xf32> to vector<1x32xf32>
    %286 = arith.mulf %283, %241 : vector<1x32xf32>
    %287 = arith.mulf %282, %284 : vector<1x32xf32>
    %288 = arith.addf %286, %287 : vector<1x32xf32>
    %289 = math.tanh %288 : vector<1x32xf32>
    %290 = arith.mulf %285, %289 : vector<1x32xf32>
    %c5 = arith.constant 5 : index
    %c0_142 = arith.constant 0 : index
    %291 = vector.load %arg12[%c5, %c0_142] : memref<8x32xf32, #tpu.memory_space<vmem>>, vector<1x32xf32>
    tpu.vector_store %arg12[%c5, %c0_142], %290 {strides = array<i32>} : memref<8x32xf32, #tpu.memory_space<vmem>>, vector<1x32xf32>,
    %292 = vector.extract_strided_slice %5 {offsets = [6, 0], sizes = [1, 128], strides = [1, 1]} : vector<8x128xf32> to vector<1x128xf32>
    %c0_143 = arith.constant 0 : index
    %c0_144 = arith.constant 0 : index
    %293 = vector.load %arg3[%c0_143, %c0_144] : memref<32x128xf32, #tpu.memory_space<vmem>>, vector<32x128xf32>
    %cst_145 = arith.constant dense<0.000000e+00> : vector<1x128xf32>
    %294 = tpu.matmul %265, %293, %cst_145 {dimension_numbers = #tpu.dot_dimension_numbers<[1], [0], [0], [1], [0, 0, 1, 1], [], []>} : vector<1x32xf32>, vector<32x128xf32>, vector<1x128xf32> -> vector<1x128xf32>
    %295 = arith.addf %292, %294 : vector<1x128xf32>
    %cst_146 = arith.constant 5.000000e-01 : f32
    %296 = vector.broadcast %cst_146 : f32 to vector<1x128xf32>
    %297 = arith.mulf %296, %295 : vector<1x128xf32>
    %298 = math.tanh %297 : vector<1x128xf32>
    %cst_147 = arith.constant 1.000000e+00 : f32
    %299 = vector.broadcast %cst_147 : f32 to vector<1x128xf32>
    %300 = arith.addf %298, %299 : vector<1x128xf32>
    %cst_148 = arith.constant 5.000000e-01 : f32
    %301 = vector.broadcast %cst_148 : f32 to vector<1x128xf32>
    %302 = arith.mulf %301, %300 : vector<1x128xf32>
    %303 = math.tanh %295 : vector<1x128xf32>
    %304 = vector.extract_strided_slice %302 {offsets = [0, 0], sizes = [1, 32], strides = [1, 1]} : vector<1x128xf32> to vector<1x32xf32>
    %305 = vector.extract_strided_slice %302 {offsets = [0, 32], sizes = [1, 32], strides = [1, 1]} : vector<1x128xf32> to vector<1x32xf32>
    %306 = vector.extract_strided_slice %303 {offsets = [0, 64], sizes = [1, 32], strides = [1, 1]} : vector<1x128xf32> to vector<1x32xf32>
    %307 = vector.extract_strided_slice %302 {offsets = [0, 96], sizes = [1, 32], strides = [1, 1]} : vector<1x128xf32> to vector<1x32xf32>
    %308 = arith.mulf %305, %263 : vector<1x32xf32>
    %309 = arith.mulf %304, %306 : vector<1x32xf32>
    %310 = arith.addf %308, %309 : vector<1x32xf32>
    %311 = math.tanh %310 : vector<1x32xf32>
    %312 = arith.mulf %307, %311 : vector<1x32xf32>
    %c0_149 = arith.constant 0 : index
    %c0_150 = arith.constant 0 : index
    %313 = vector.load %arg11[%c0_149, %c0_150] : memref<1x64xf32, #tpu.memory_space<vmem>>, vector<1x32xf32>
    tpu.vector_store %arg11[%c0_149, %c0_150], %312 {strides = array<i32>} : memref<1x64xf32, #tpu.memory_space<vmem>>, vector<1x32xf32>,
    %c0_151 = arith.constant 0 : index
    %c32_152 = arith.constant 32 : index
    %314 = vector.load %arg11[%c0_151, %c32_152] : memref<1x64xf32, #tpu.memory_space<vmem>>, vector<1x32xf32>
    tpu.vector_store %arg11[%c0_151, %c32_152], %290 {strides = array<i32>} : memref<1x64xf32, #tpu.memory_space<vmem>>, vector<1x32xf32>,
    %c0_153 = arith.constant 0 : index
    %c0_154 = arith.constant 0 : index
    %315 = vector.load %arg11[%c0_153, %c0_154] : memref<1x64xf32, #tpu.memory_space<vmem>>, vector<1x64xf32>
    %c0_155 = arith.constant 0 : index
    %c0_156 = arith.constant 0 : index
    %c0_157 = arith.constant 0 : index
    %316 = vector.load %arg4[%c0_155, %c0_156, %c0_157] : memref<1x64x128xf32, #tpu.memory_space<vmem>>, vector<1x64x128xf32>
    %317 = vector.shape_cast %316 : vector<1x64x128xf32> to vector<64x128xf32>
    %cst_158 = arith.constant dense<0.000000e+00> : vector<1x128xf32>
    %318 = tpu.matmul %315, %317, %cst_158 {dimension_numbers = #tpu.dot_dimension_numbers<[1], [0], [0], [1], [0, 0, 1, 1], [], []>} : vector<1x64xf32>, vector<64x128xf32>, vector<1x128xf32> -> vector<1x128xf32>
    %c1_159 = arith.constant 1 : index
    %c0_160 = arith.constant 0 : index
    %319 = vector.load %arg5[%c1_159, %c0_160] : memref<2x128xf32, #tpu.memory_space<vmem>>, vector<1x128xf32>
    %320 = arith.addf %318, %319 : vector<1x128xf32>
    %cst_161 = arith.constant 5.000000e-01 : f32
    %321 = vector.broadcast %cst_161 : f32 to vector<1x128xf32>
    %322 = arith.mulf %321, %320 : vector<1x128xf32>
    %323 = math.tanh %322 : vector<1x128xf32>
    %cst_162 = arith.constant 1.000000e+00 : f32
    %324 = vector.broadcast %cst_162 : f32 to vector<1x128xf32>
    %325 = arith.addf %323, %324 : vector<1x128xf32>
    %cst_163 = arith.constant 5.000000e-01 : f32
    %326 = vector.broadcast %cst_163 : f32 to vector<1x128xf32>
    %327 = arith.mulf %326, %325 : vector<1x128xf32>
    %328 = math.tanh %320 : vector<1x128xf32>
    %329 = vector.extract_strided_slice %327 {offsets = [0, 0], sizes = [1, 32], strides = [1, 1]} : vector<1x128xf32> to vector<1x32xf32>
    %330 = vector.extract_strided_slice %327 {offsets = [0, 32], sizes = [1, 32], strides = [1, 1]} : vector<1x128xf32> to vector<1x32xf32>
    %331 = vector.extract_strided_slice %328 {offsets = [0, 64], sizes = [1, 32], strides = [1, 1]} : vector<1x128xf32> to vector<1x32xf32>
    %332 = vector.extract_strided_slice %327 {offsets = [0, 96], sizes = [1, 32], strides = [1, 1]} : vector<1x128xf32> to vector<1x32xf32>
    %333 = arith.mulf %330, %288 : vector<1x32xf32>
    %334 = arith.mulf %329, %331 : vector<1x32xf32>
    %335 = arith.addf %333, %334 : vector<1x32xf32>
    %336 = math.tanh %335 : vector<1x32xf32>
    %337 = arith.mulf %332, %336 : vector<1x32xf32>
    %c6 = arith.constant 6 : index
    %c0_164 = arith.constant 0 : index
    %338 = vector.load %arg12[%c6, %c0_164] : memref<8x32xf32, #tpu.memory_space<vmem>>, vector<1x32xf32>
    tpu.vector_store %arg12[%c6, %c0_164], %337 {strides = array<i32>} : memref<8x32xf32, #tpu.memory_space<vmem>>, vector<1x32xf32>,
    %339 = vector.extract_strided_slice %5 {offsets = [7, 0], sizes = [1, 128], strides = [1, 1]} : vector<8x128xf32> to vector<1x128xf32>
    %c0_165 = arith.constant 0 : index
    %c0_166 = arith.constant 0 : index
    %340 = vector.load %arg3[%c0_165, %c0_166] : memref<32x128xf32, #tpu.memory_space<vmem>>, vector<32x128xf32>
    %cst_167 = arith.constant dense<0.000000e+00> : vector<1x128xf32>
    %341 = tpu.matmul %312, %340, %cst_167 {dimension_numbers = #tpu.dot_dimension_numbers<[1], [0], [0], [1], [0, 0, 1, 1], [], []>} : vector<1x32xf32>, vector<32x128xf32>, vector<1x128xf32> -> vector<1x128xf32>
    %342 = arith.addf %339, %341 : vector<1x128xf32>
    %cst_168 = arith.constant 5.000000e-01 : f32
    %343 = vector.broadcast %cst_168 : f32 to vector<1x128xf32>
    %344 = arith.mulf %343, %342 : vector<1x128xf32>
    %345 = math.tanh %344 : vector<1x128xf32>
    %cst_169 = arith.constant 1.000000e+00 : f32
    %346 = vector.broadcast %cst_169 : f32 to vector<1x128xf32>
    %347 = arith.addf %345, %346 : vector<1x128xf32>
    %cst_170 = arith.constant 5.000000e-01 : f32
    %348 = vector.broadcast %cst_170 : f32 to vector<1x128xf32>
    %349 = arith.mulf %348, %347 : vector<1x128xf32>
    %350 = math.tanh %342 : vector<1x128xf32>
    %351 = vector.extract_strided_slice %349 {offsets = [0, 0], sizes = [1, 32], strides = [1, 1]} : vector<1x128xf32> to vector<1x32xf32>
    %352 = vector.extract_strided_slice %349 {offsets = [0, 32], sizes = [1, 32], strides = [1, 1]} : vector<1x128xf32> to vector<1x32xf32>
    %353 = vector.extract_strided_slice %350 {offsets = [0, 64], sizes = [1, 32], strides = [1, 1]} : vector<1x128xf32> to vector<1x32xf32>
    %354 = vector.extract_strided_slice %349 {offsets = [0, 96], sizes = [1, 32], strides = [1, 1]} : vector<1x128xf32> to vector<1x32xf32>
    %355 = arith.mulf %352, %310 : vector<1x32xf32>
    %356 = arith.mulf %351, %353 : vector<1x32xf32>
    %357 = arith.addf %355, %356 : vector<1x32xf32>
    %358 = math.tanh %357 : vector<1x32xf32>
    %359 = arith.mulf %354, %358 : vector<1x32xf32>
    %c0_171 = arith.constant 0 : index
    %c0_172 = arith.constant 0 : index
    %360 = vector.load %arg11[%c0_171, %c0_172] : memref<1x64xf32, #tpu.memory_space<vmem>>, vector<1x32xf32>
    tpu.vector_store %arg11[%c0_171, %c0_172], %359 {strides = array<i32>} : memref<1x64xf32, #tpu.memory_space<vmem>>, vector<1x32xf32>,
    %c0_173 = arith.constant 0 : index
    %c32_174 = arith.constant 32 : index
    %361 = vector.load %arg11[%c0_173, %c32_174] : memref<1x64xf32, #tpu.memory_space<vmem>>, vector<1x32xf32>
    tpu.vector_store %arg11[%c0_173, %c32_174], %337 {strides = array<i32>} : memref<1x64xf32, #tpu.memory_space<vmem>>, vector<1x32xf32>,
    %c0_175 = arith.constant 0 : index
    %c0_176 = arith.constant 0 : index
    %362 = vector.load %arg11[%c0_175, %c0_176] : memref<1x64xf32, #tpu.memory_space<vmem>>, vector<1x64xf32>
    %c0_177 = arith.constant 0 : index
    %c0_178 = arith.constant 0 : index
    %c0_179 = arith.constant 0 : index
    %363 = vector.load %arg4[%c0_177, %c0_178, %c0_179] : memref<1x64x128xf32, #tpu.memory_space<vmem>>, vector<1x64x128xf32>
    %364 = vector.shape_cast %363 : vector<1x64x128xf32> to vector<64x128xf32>
    %cst_180 = arith.constant dense<0.000000e+00> : vector<1x128xf32>
    %365 = tpu.matmul %362, %364, %cst_180 {dimension_numbers = #tpu.dot_dimension_numbers<[1], [0], [0], [1], [0, 0, 1, 1], [], []>} : vector<1x64xf32>, vector<64x128xf32>, vector<1x128xf32> -> vector<1x128xf32>
    %c1_181 = arith.constant 1 : index
    %c0_182 = arith.constant 0 : index
    %366 = vector.load %arg5[%c1_181, %c0_182] : memref<2x128xf32, #tpu.memory_space<vmem>>, vector<1x128xf32>
    %367 = arith.addf %365, %366 : vector<1x128xf32>
    %cst_183 = arith.constant 5.000000e-01 : f32
    %368 = vector.broadcast %cst_183 : f32 to vector<1x128xf32>
    %369 = arith.mulf %368, %367 : vector<1x128xf32>
    %370 = math.tanh %369 : vector<1x128xf32>
    %cst_184 = arith.constant 1.000000e+00 : f32
    %371 = vector.broadcast %cst_184 : f32 to vector<1x128xf32>
    %372 = arith.addf %370, %371 : vector<1x128xf32>
    %cst_185 = arith.constant 5.000000e-01 : f32
    %373 = vector.broadcast %cst_185 : f32 to vector<1x128xf32>
    %374 = arith.mulf %373, %372 : vector<1x128xf32>
    %375 = math.tanh %367 : vector<1x128xf32>
    %376 = vector.extract_strided_slice %374 {offsets = [0, 0], sizes = [1, 32], strides = [1, 1]} : vector<1x128xf32> to vector<1x32xf32>
    %377 = vector.extract_strided_slice %374 {offsets = [0, 32], sizes = [1, 32], strides = [1, 1]} : vector<1x128xf32> to vector<1x32xf32>
    %378 = vector.extract_strided_slice %375 {offsets = [0, 64], sizes = [1, 32], strides = [1, 1]} : vector<1x128xf32> to vector<1x32xf32>
    %379 = vector.extract_strided_slice %374 {offsets = [0, 96], sizes = [1, 32], strides = [1, 1]} : vector<1x128xf32> to vector<1x32xf32>
    %380 = arith.mulf %377, %335 : vector<1x32xf32>
    %381 = arith.mulf %376, %378 : vector<1x32xf32>
    %382 = arith.addf %380, %381 : vector<1x32xf32>
    %383 = math.tanh %382 : vector<1x32xf32>
    %384 = arith.mulf %379, %383 : vector<1x32xf32>
    %c7 = arith.constant 7 : index
    %c0_186 = arith.constant 0 : index
    %385 = vector.load %arg12[%c7, %c0_186] : memref<8x32xf32, #tpu.memory_space<vmem>>, vector<1x32xf32>
    tpu.vector_store %arg12[%c7, %c0_186], %384 {strides = array<i32>} : memref<8x32xf32, #tpu.memory_space<vmem>>, vector<1x32xf32>,
    %c0_187 = arith.constant 0 : index
    %c0_188 = arith.constant 0 : index
    %386 = vector.load %arg12[%c0_187, %c0_188] : memref<8x32xf32, #tpu.memory_space<vmem>>, vector<8x32xf32>
    %c0_189 = arith.constant 0 : index
    %c0_190 = arith.constant 0 : index
    %387 = vector.load %arg6[%c0_189, %c0_190] : memref<32x8xf32, #tpu.memory_space<vmem>>, vector<32x8xf32>
    %cst_191 = arith.constant dense<0.000000e+00> : vector<8x8xf32>
    %388 = tpu.matmul %386, %387, %cst_191 {dimension_numbers = #tpu.dot_dimension_numbers<[1], [0], [0], [1], [0, 0, 1, 1], [], []>} : vector<8x32xf32>, vector<32x8xf32>, vector<8x8xf32> -> vector<8x8xf32>
    %c0_192 = arith.constant 0 : index
    %c0_193 = arith.constant 0 : index
    %389 = vector.load %arg7[%c0_192, %c0_193] : memref<1x8xf32, #tpu.memory_space<vmem>>, vector<1x8xf32>
    %390 = vector.broadcast %389 : vector<1x8xf32> to vector<8x8xf32>
    %391 = arith.addf %388, %390 : vector<8x8xf32>
    %c0_194 = arith.constant 0 : index
    %c0_195 = arith.constant 0 : index
    %392 = vector.load %arg8[%c0_194, %c0_195] : memref<8x8xf32, #tpu.memory_space<vmem>>, vector<8x8xf32>
    tpu.vector_store %arg8[%c0_194, %c0_195], %391 {strides = array<i32>} : memref<8x8xf32, #tpu.memory_space<vmem>>, vector<8x8xf32>,
    %c0_196 = arith.constant 0 : index
    %c0_197 = arith.constant 0 : index
    %393 = vector.load %arg9[%c0_196, %c0_197] : memref<2x32xf32, #tpu.memory_space<vmem>>, vector<1x32xf32>
    tpu.vector_store %arg9[%c0_196, %c0_197], %359 {strides = array<i32>} : memref<2x32xf32, #tpu.memory_space<vmem>>, vector<1x32xf32>,
    %c0_198 = arith.constant 0 : index
    %c0_199 = arith.constant 0 : index
    %394 = vector.load %arg10[%c0_198, %c0_199] : memref<2x32xf32, #tpu.memory_space<vmem>>, vector<1x32xf32>
    tpu.vector_store %arg10[%c0_198, %c0_199], %357 {strides = array<i32>} : memref<2x32xf32, #tpu.memory_space<vmem>>, vector<1x32xf32>,
    %c1_200 = arith.constant 1 : index
    %c0_201 = arith.constant 0 : index
    %395 = vector.load %arg9[%c1_200, %c0_201] : memref<2x32xf32, #tpu.memory_space<vmem>>, vector<1x32xf32>
    tpu.vector_store %arg9[%c1_200, %c0_201], %384 {strides = array<i32>} : memref<2x32xf32, #tpu.memory_space<vmem>>, vector<1x32xf32>,
    %c1_202 = arith.constant 1 : index
    %c0_203 = arith.constant 0 : index
    %396 = vector.load %arg10[%c1_202, %c0_203] : memref<2x32xf32, #tpu.memory_space<vmem>>, vector<1x32xf32>
    tpu.vector_store %arg10[%c1_202, %c0_203], %382 {strides = array<i32>} : memref<2x32xf32, #tpu.memory_space<vmem>>, vector<1x32xf32>,
    return
  }
}

</mosaic_0001>

<llo_original>
// kernel: decoder_forward.1
$region0: #{decoder_forward.1}
  #allocation0 [shape = 'u32[]', space=smem, size = 0x4, offset = 0x4, fixed_abs, tag = 'smem constant byte address 0x4 - core index']
  #allocation1 [shape = 'u32[144,128]{1,0:T(1,128)}', space=vmem, size = 0x12000, scoped, tag = 'internal scratch']
  #allocation2 [shape = 'f32[1,64]{1,0:T(1,128)}', space=vmem, size = 0x200, scoped, tag = 'scratch operand']
  #allocation3 [shape = 'f32[8,32]{1,0:T(8,128)}', space=vmem, size = 0x1000, scoped, tag = 'scratch operand']
  %s0 = inlined_call_operand.hbm [shape: f32[8,16], index: 0, kind: input, shape index: {}]
  %s1 = inlined_call_operand.vmem [shape: f32[2,32], index: 1, kind: input, shape index: {}]
  %s2 = inlined_call_operand.vmem [shape: f32[16,128], index: 2, kind: input, shape index: {}]
  %s3 = inlined_call_operand.vmem [shape: f32[32,128], index: 3, kind: input, shape index: {}]
  %s4 = inlined_call_operand.hbm [shape: f32[1,64,128], index: 4, kind: input, shape index: {}]
  %s5 = inlined_call_operand.hbm [shape: f32[2,128], index: 5, kind: input, shape index: {}]
  %s6 = inlined_call_operand.vmem [shape: f32[32,8], index: 6, kind: input, shape index: {}]
  %s7 = inlined_call_operand.vmem [shape: f32[1,8], index: 7, kind: input, shape index: {}]
  %s8 = inlined_call_operand.hbm [shape: f32[8,8], index: 8, kind: output, shape index: {0}]
  %s9 = inlined_call_operand.hbm [shape: f32[2,32], index: 9, kind: output, shape index: {1}]
  %s10 = inlined_call_operand.hbm [shape: f32[2,32], index: 10, kind: output, shape index: {2}]
  %11 = xla_tuple %s8, %s9, %s10
  %s12 = sld [smem:[#allocation0]]
  $region70: #{decoder_forward.1} parent=0
    _
  %s14 = ssub.s32 1, %s12
  %s15 = scalar_select 0, %s14, %s12
  $region1: #{decoder_forward.1} parent=0
    #allocation4 [shape = 'u8[4096]{0}', space=vmem, size = 0x1000, scoped, tag = 'input window, operand 0, single buffered']
    #allocation5 [shape = 's32[1]{0}', space=sflag, size = 0x4, scoped, tag = 'scoped memory for decoder_forward.1']
    #allocation6 [shape = 's32[1]{0}', space=sflag, size = 0x4, scoped, tag = 'scoped memory for decoder_forward.1']
    #allocation7 [shape = 'u8[32768]{0}', space=vmem, size = 0x8000, scoped, tag = 'input window, operand 4, single buffered']
    #allocation8 [shape = 's32[1]{0}', space=sflag, size = 0x4, scoped, tag = 'scoped memory for decoder_forward.1']
    #allocation9 [shape = 'u8[1024]{0}', space=vmem, size = 0x400, scoped, tag = 'input window, operand 5, single buffered']
    #allocation10 [shape = 'u8[4096]{0}', space=vmem, size = 0x1000, scoped, tag = 'output window, operand 0, single buffered']
    #allocation11 [shape = 'u8[1024]{0}', space=vmem, size = 0x400, scoped, tag = 'output window, operand 1, single buffered']
    #allocation12 [shape = 's32[1]{0}', space=sflag, size = 0x4, scoped, tag = 'scoped memory for decoder_forward.1']
    #allocation13 [shape = 'u8[1024]{0}', space=vmem, size = 0x400, scoped, tag = 'output window, operand 2, single buffered']
    %16 = vsyncpa [#allocation5], 0
    %17 = vsyncpa [#allocation8], 0
    %18 = vsyncpa [#allocation6], 0
    %19 = vsyncpa [#allocation12], 0
    // Predicated region
    $region2: #{decoder_forward.1} parent=1 // pred_check
      _
    $region3: #{decoder_forward.1} parent=1 // pred_check_branch
      %21 = sbr.rel (0) target = $region5
    $region4: #{decoder_forward.1} parent=1 // pred_region
      %s23 = ssub.s32 128, 128
      %24 = vsyncadd [#allocation5], %s23
      %s26 = sshll.u32 [#allocation4], 4
      %s27 = int_to_ptr.vmem [resolvable:$true] %s26
      %29 = dma.hbm_to_vmem [thread:$0]  %s0, 128, %s27, [#allocation5]
    $region5: #{decoder_forward.1} parent=1 // pred_fallthru
      _
    // Predicated region
    $region6: #{decoder_forward.1} parent=1 // pred_check
      _
    $region7: #{decoder_forward.1} parent=1 // pred_check_branch
      %31 = sbr.rel (0) target = $region9
    $region8: #{decoder_forward.1} parent=1 // pred_region
      _
    $region9: #{decoder_forward.1} parent=1 // pred_fallthru
      _
    // Predicated region
    $region10: #{decoder_forward.1} parent=1 // pred_check
      _
    $region11: #{decoder_forward.1} parent=1 // pred_check_branch
      %33 = sbr.rel (0) target = $region13
    $region12: #{decoder_forward.1} parent=1 // pred_region
      _
    $region13: #{decoder_forward.1} parent=1 // pred_fallthru
      _
    // Predicated region
    $region14: #{decoder_forward.1} parent=1 // pred_check
      _
    $region15: #{decoder_forward.1} parent=1 // pred_check_branch
      %35 = sbr.rel (0) target = $region17
    $region16: #{decoder_forward.1} parent=1 // pred_region
      _
    $region17: #{decoder_forward.1} parent=1 // pred_fallthru
      _
    // Predicated region
    $region18: #{decoder_forward.1} parent=1 // pred_check
      _
    $region19: #{decoder_forward.1} parent=1 // pred_check_branch
      %37 = sbr.rel (0) target = $region21
    $region20: #{decoder_forward.1} parent=1 // pred_region
      %s39 = ssub.s32 1024, 1024
      %40 = vsyncadd [#allocation8], %s39
      %s41 = sshll.u32 [#allocation7], 4
      %s42 = int_to_ptr.vmem [resolvable:$true] %s41
      %47 = dma.hbm_to_vmem [thread:$0]  %s4, 1024, %s42, [#allocation8], 128, 128, 8
    $region21: #{decoder_forward.1} parent=1 // pred_fallthru
      _
    // Predicated region
    $region22: #{decoder_forward.1} parent=1 // pred_check
      _
    $region23: #{decoder_forward.1} parent=1 // pred_check_branch
      %49 = sbr.rel (0) target = $region25
    $region24: #{decoder_forward.1} parent=1 // pred_region
      %s51 = ssub.s32 32, 32
      %52 = vsyncadd [#allocation8], %s51
      %s54 = sshll.u32 [#allocation9], 4
      %s55 = int_to_ptr.vmem [resolvable:$true] %s54
      %57 = dma.hbm_to_vmem [thread:$0]  %s5, 32, %s55, [#allocation8]
    $region25: #{decoder_forward.1} parent=1 // pred_fallthru
      _
    // Predicated region
    $region26: #{decoder_forward.1} parent=1 // pred_check
      _
    $region27: #{decoder_forward.1} parent=1 // pred_check_branch
      %59 = sbr.rel (0) target = $region29
    $region28: #{decoder_forward.1} parent=1 // pred_region
      _
    $region29: #{decoder_forward.1} parent=1 // pred_fallthru
      _
    // Predicated region
    $region30: #{decoder_forward.1} parent=1 // pred_check
      _
    $region31: #{decoder_forward.1} parent=1 // pred_check_branch
      %61 = sbr.rel (0) target = $region33
    $region32: #{decoder_forward.1} parent=1 // pred_region
      _
    $region33: #{decoder_forward.1} parent=1 // pred_fallthru
      _
    // Predicated region
    $region34: #{decoder_forward.1} parent=1 // pred_check
      _
    $region35: #{decoder_forward.1} parent=1 // pred_check_branch
      %63 = sbr.rel (0) target = $region37
    $region36: #{decoder_forward.1} parent=1 // pred_region
      %64 = dma.done [#allocation5], 128
    $region37: #{decoder_forward.1} parent=1 // pred_fallthru
      _
    // Predicated region
    $region38: #{decoder_forward.1} parent=1 // pred_check
      _
    $region39: #{decoder_forward.1} parent=1 // pred_check_branch
      %66 = sbr.rel (0) target = $region41
    $region40: #{decoder_forward.1} parent=1 // pred_region
      %67 = dma.done [#allocation8], 1024
    $region41: #{decoder_forward.1} parent=1 // pred_fallthru
      _
    // Predicated region
    $region42: #{decoder_forward.1} parent=1 // pred_check
      _
    $region43: #{decoder_forward.1} parent=1 // pred_check_branch
      %69 = sbr.rel (0) target = $region45
    $region44: #{decoder_forward.1} parent=1 // pred_region
      %70 = dma.done [#allocation8], 32
    $region45: #{decoder_forward.1} parent=1 // pred_fallthru
      _
    %v71 = vld [vmem:[#allocation4] sm:$0xff]
    %v72 = vld [vmem:[%s2] sm:$0xff]
    %v73 = vld [vmem:[%s2 + $0x8] sm:$0xff]
    %v74 = vld [vmem:[#allocation9] sm:$0x1]
    %v75 = vlaneseq
    %v76 = vshrl.u32 %v75, 7
    %v77 = vsub.s32 0, %v76
    %v78 = vrot.slane %v74, %v77
    %vm79 = vcmask 130048
    %v81 = vsel %vm79, %v71, 0
    %83 = vmatprep.subr.mxu0 0.0
    %84 = vmatpush1.msra.mxu0 %v72
    %85 = vmatprep.subr.mxu0 0.0
    %86 = vmatpush1.msra.mxu0 %v73
    %87 = vmatprep.subr.mxu0 0.0
    %88 = vmatpush1.msra.mxu0 0.0
    %89 = vmatprep.subr.mxu0 0.0
    %90 = vmatpush1.msra.mxu0 0.0
    %91 = vmatprep.subr.mxu0 0.0
    %92 = vmatpush1.msra.mxu0 0.0
    %93 = vmatprep.subr.mxu0 0.0
    %94 = vmatpush1.msra.mxu0 0.0
    %95 = vmatprep.subr.mxu0 0.0
    %96 = vmatpush1.msra.mxu0 0.0
    %97 = vmatprep.subr.mxu0 0.0
    %98 = vmatpush1.msra.mxu0 0.0
    %99 = vmatprep.subr.mxu0 0.0
    %100 = vmatpush1.msra.mxu0 0.0
    %101 = vmatprep.subr.mxu0 0.0
    %102 = vmatpush1.msra.mxu0 0.0
    %103 = vmatprep.subr.mxu0 0.0
    %104 = vmatpush1.msra.mxu0 0.0
    %105 = vmatprep.subr.mxu0 0.0
    %106 = vmatpush1.msra.mxu0 0.0
    %107 = vmatprep.subr.mxu0 0.0
    %108 = vmatpush1.msra.mxu0 0.0
    %109 = vmatprep.subr.mxu0 0.0
    %110 = vmatpush1.msra.mxu0 0.0
    %111 = vmatprep.subr.mxu0 0.0
    %112 = vmatpush1.msra.mxu0 0.0
    %113 = vmatprep.subr.mxu0 0.0
    %114 = vmatpush1.msra.mxu0 0.0
    %115 = vmatprep.subr.mxu0 0.0
    %116 = vmatpush1.msra.mxu0 0.0
    %117 = vmatprep.subr.mxu0 0.0
    %118 = vmatpush1.msra.mxu0 0.0
    %119 = vmatprep.subr.mxu0 0.0
    %120 = vmatpush1.msra.mxu0 0.0
    %121 = vmatprep.subr.mxu0 0.0
    %122 = vmatpush1.msra.mxu0 0.0
    %123 = vmatprep.subr.mxu0 0.0
    %124 = vmatpush1.msra.mxu0 0.0
    %125 = vmatprep.subr.mxu0 0.0
    %126 = vmatpush1.msra.mxu0 0.0
    %127 = vmatprep.subr.mxu0 0.0
    %128 = vmatpush1.msra.mxu0 0.0
    %129 = vmatprep.subr.mxu0 0.0
    %130 = vmatpush1.msra.mxu0 0.0
    %131 = vmatprep.subr.mxu0 0.0
    %132 = vmatpush1.msra.mxu0 0.0
    %133 = vmatprep.subr.mxu0 0.0
    %134 = vmatpush1.msra.mxu0 0.0
    %135 = vmatprep.subr.mxu0 0.0
    %136 = vmatpush1.msra.mxu0 0.0
    %137 = vmatprep.subr.mxu0 0.0
    %138 = vmatpush1.msra.mxu0 0.0
    %139 = vmatprep.subr.mxu0 0.0
    %140 = vmatpush1.msra.mxu0 0.0
    %141 = vmatprep.subr.mxu0 0.0
    %142 = vmatpush1.msra.mxu0 0.0
    %143 = vmatprep.subr.mxu0 0.0
    %144 = vmatpush1.msra.mxu0 0.0
    %145 = vmatprep.subr.mxu0 0.0
    %146 = vmatpush1.msra.mxu0 0.0
    %147 = vmatprep.mubr.f32.mxu0 0.0
    %148 = vmatmul.mubr.f32.gmra.mrb[0].mxu0 %v81
    %v149 = vpop.f32.mrb[0].mxu0
    %v150 = vadd.f32 %v78, %v149
    %v151 = vpop.f32.mrb[0].mxu0
    %152 = vdwg.mxu0
    %v153 = vld [vmem:[%s1] sm:$0x1]
    %v154 = vld [vmem:[%s1 + $0x1] sm:$0x1]
    %v155 = vld [vmem:[%s3] sm:$0xff]
    %v156 = vld [vmem:[%s3 + $0x8] sm:$0xff]
    %v157 = vld [vmem:[%s3 + $0x10] sm:$0xff]
    %v158 = vld [vmem:[%s3 + $0x18] sm:$0xff]
    %vm159 = vcmask 261120
    %v161 = vsel %vm159, %v153, 0
    %163 = vmatprep.subr.mxu0 0.0
    %164 = vmatpush1.msra.mxu0 %v155
    %165 = vmatprep.subr.mxu0 0.0
    %166 = vmatpush1.msra.mxu0 %v156
    %167 = vmatprep.subr.mxu0 0.0
    %168 = vmatpush1.msra.mxu0 %v157
    %169 = vmatprep.subr.mxu0 0.0
    %170 = vmatpush1.msra.mxu0 %v158
    %171 = vmatprep.subr.mxu0 0.0
    %172 = vmatpush1.msra.mxu0 0.0
    %173 = vmatprep.subr.mxu0 0.0
    %174 = vmatpush1.msra.mxu0 0.0
    %175 = vmatprep.subr.mxu0 0.0
    %176 = vmatpush1.msra.mxu0 0.0
    %177 = vmatprep.subr.mxu0 0.0
    %178 = vmatpush1.msra.mxu0 0.0
    %179 = vmatprep.subr.mxu0 0.0
    %180 = vmatpush1.msra.mxu0 0.0
    %181 = vmatprep.subr.mxu0 0.0
    %182 = vmatpush1.msra.mxu0 0.0
    %183 = vmatprep.subr.mxu0 0.0
    %184 = vmatpush1.msra.mxu0 0.0
    %185 = vmatprep.subr.mxu0 0.0
    %186 = vmatpush1.msra.mxu0 0.0
    %187 = vmatprep.subr.mxu0 0.0
    %188 = vmatpush1.msra.mxu0 0.0
    %189 = vmatprep.subr.mxu0 0.0
    %190 = vmatpush1.msra.mxu0 0.0
    %191 = vmatprep.subr.mxu0 0.0
    %192 = vmatpush1.msra.mxu0 0.0
    %193 = vmatprep.subr.mxu0 0.0
    %194 = vmatpush1.msra.mxu0 0.0
    %195 = vmatprep.subr.mxu0 0.0
    %196 = vmatpush1.msra.mxu0 0.0
    %197 = vmatprep.subr.mxu0 0.0
    %198 = vmatpush1.msra.mxu0 0.0
    %199 = vmatprep.subr.mxu0 0.0
    %200 = vmatpush1.msra.mxu0 0.0
    %201 = vmatprep.subr.mxu0 0.0
    %202 = vmatpush1.msra.mxu0 0.0
    %203 = vmatprep.subr.mxu0 0.0
    %204 = vmatpush1.msra.mxu0 0.0
    %205 = vmatprep.subr.mxu0 0.0
    %206 = vmatpush1.msra.mxu0 0.0
    %207 = vmatprep.subr.mxu0 0.0
    %208 = vmatpush1.msra.mxu0 0.0
    %209 = vmatprep.subr.mxu0 0.0
    %210 = vmatpush1.msra.mxu0 0.0
    %211 = vmatprep.subr.mxu0 0.0
    %212 = vmatpush1.msra.mxu0 0.0
    %213 = vmatprep.subr.mxu0 0.0
    %214 = vmatpush1.msra.mxu0 0.0
    %215 = vmatprep.subr.mxu0 0.0
    %216 = vmatpush1.msra.mxu0 0.0
    %217 = vmatprep.subr.mxu0 0.0
    %218 = vmatpush1.msra.mxu0 0.0
    %219 = vmatprep.subr.mxu0 0.0
    %220 = vmatpush1.msra.mxu0 0.0
    %221 = vmatprep.subr.mxu0 0.0
    %222 = vmatpush1.msra.mxu0 0.0
    %223 = vmatprep.subr.mxu0 0.0
    %224 = vmatpush1.msra.mxu0 0.0
    %225 = vmatprep.subr.mxu0 0.0
    %226 = vmatpush1.msra.mxu0 0.0
    %227 = vmatprep.mubr.f32.mxu0 0.0
    %228 = vmatmul.mubr.f32.gmra.mrb[0].mxu0 %v161
    %v229 = vpop.f32.mrb[0].mxu0
    %v230 = vadd.f32 0.0, %v229
    %v231 = vpop.f32.mrb[0].mxu0
    %232 = vdwg.mxu0
    %v233 = vadd.f32 %v150, %v230
    %v234 = vmul.f32 %v233, 0.5
    %v235 = vtanh.pop %v234
    %v236 = vadd.f32 %v235, 1.0
    %v237 = vmul.f32 %v236, 0.5
    %v238 = vtanh.pop %v233
    %v239 = vmul.f32 %v237, 0.0
    %241 = vrot.lane.b32.xlu0 %v238, 64
    %v242 = vpop.permute.xlu0 %241
    %v244 = vmul.f32 %v237, %v242
    %246 = vrot.lane.b32.xlu0 %v244, 32
    %v247 = vpop.permute.xlu0 %246
    %v249 = vadd.f32 %v239, %v247
    %v250 = vtanh.pop %v249
    %252 = vrot.lane.b32.xlu0 %v250, 64
    %v253 = vpop.permute.xlu0 %252
    %v255 = vmul.f32 %v237, %v253
    %257 = vrot.lane.b32.xlu0 %v255, 32
    %v258 = vpop.permute.xlu0 %257
    %vm260 = vcmask 253952
    %261 = vst.msk [vmem:[#allocation2] sm:$0x1] %vm260, %v258
    %263 = vrot.lane.b32.xlu0 %v154, 32
    %v264 = vpop.permute.xlu0 %263
    %vm266 = vcmask 516352
    %267 = vst.msk [vmem:[#allocation2] sm:$0x1] %vm266, %v264
    %v268 = vld [vmem:[#allocation2] sm:$0x1]
    %v269 = vld [vmem:[#allocation7] sm:$0xff]
    %v270 = vld [vmem:[#allocation7 + $0x8] sm:$0xff]
    %v271 = vld [vmem:[#allocation7 + $0x10] sm:$0xff]
    %v272 = vld [vmem:[#allocation7 + $0x18] sm:$0xff]
    %v273 = vld [vmem:[#allocation7 + $0x20] sm:$0xff]
    %v274 = vld [vmem:[#allocation7 + $0x28] sm:$0xff]
    %v275 = vld [vmem:[#allocation7 + $0x30] sm:$0xff]
    %v276 = vld [vmem:[#allocation7 + $0x38] sm:$0xff]
    %v277 = vld [vmem:[#allocation9 + $0x1] sm:$0x1]
    %vm278 = vcmask 523264
    %v280 = vsel %vm278, %v268, 0
    %282 = vmatprep.subr.mxu0 0.0
    %283 = vmatpush1.msra.mxu0 %v269
    %284 = vmatprep.subr.mxu0 0.0
    %285 = vmatpush1.msra.mxu0 %v270
    %286 = vmatprep.subr.mxu0 0.0
    %287 = vmatpush1.msra.mxu0 %v271
    %288 = vmatprep.subr.mxu0 0.0
    %289 = vmatpush1.msra.mxu0 %v272
    %290 = vmatprep.subr.mxu0 0.0
    %291 = vmatpush1.msra.mxu0 %v273
    %292 = vmatprep.subr.mxu0 0.0
    %293 = vmatpush1.msra.mxu0 %v274
    %294 = vmatprep.subr.mxu0 0.0
    %295 = vmatpush1.msra.mxu0 %v275
    %296 = vmatprep.subr.mxu0 0.0
    %297 = vmatpush1.msra.mxu0 %v276
    %298 = vmatprep.subr.mxu0 0.0
    %299 = vmatpush1.msra.mxu0 0.0
    %300 = vmatprep.subr.mxu0 0.0
    %301 = vmatpush1.msra.mxu0 0.0
    %302 = vmatprep.subr.mxu0 0.0
    %303 = vmatpush1.msra.mxu0 0.0
    %304 = vmatprep.subr.mxu0 0.0
    %305 = vmatpush1.msra.mxu0 0.0
    %306 = vmatprep.subr.mxu0 0.0
    %307 = vmatpush1.msra.mxu0 0.0
    %308 = vmatprep.subr.mxu0 0.0
    %309 = vmatpush1.msra.mxu0 0.0
    %310 = vmatprep.subr.mxu0 0.0
    %311 = vmatpush1.msra.mxu0 0.0
    %312 = vmatprep.subr.mxu0 0.0
    %313 = vmatpush1.msra.mxu0 0.0
    %314 = vmatprep.subr.mxu0 0.0
    %315 = vmatpush1.msra.mxu0 0.0
    %316 = vmatprep.subr.mxu0 0.0
    %317 = vmatpush1.msra.mxu0 0.0
    %318 = vmatprep.subr.mxu0 0.0
    %319 = vmatpush1.msra.mxu0 0.0
    %320 = vmatprep.subr.mxu0 0.0
    %321 = vmatpush1.msra.mxu0 0.0
    %322 = vmatprep.subr.mxu0 0.0
    %323 = vmatpush1.msra.mxu0 0.0
    %324 = vmatprep.subr.mxu0 0.0
    %325 = vmatpush1.msra.mxu0 0.0
    %326 = vmatprep.subr.mxu0 0.0
    %327 = vmatpush1.msra.mxu0 0.0
    %328 = vmatprep.subr.mxu0 0.0
    %329 = vmatpush1.msra.mxu0 0.0
    %330 = vmatprep.subr.mxu0 0.0
    %331 = vmatpush1.msra.mxu0 0.0
    %332 = vmatprep.subr.mxu0 0.0
    %333 = vmatpush1.msra.mxu0 0.0
    %334 = vmatprep.subr.mxu0 0.0
    %335 = vmatpush1.msra.mxu0 0.0
    %336 = vmatprep.subr.mxu0 0.0
    %337 = vmatpush1.msra.mxu0 0.0
    %338 = vmatprep.subr.mxu0 0.0
    %339 = vmatpush1.msra.mxu0 0.0
    %340 = vmatprep.subr.mxu0 0.0
    %341 = vmatpush1.msra.mxu0 0.0
    %342 = vmatprep.subr.mxu0 0.0
    %343 = vmatpush1.msra.mxu0 0.0
    %344 = vmatprep.subr.mxu0 0.0
    %345 = vmatpush1.msra.mxu0 0.0
    %346 = vmatprep.mubr.f32.mxu0 0.0
    %347 = vmatmul.mubr.f32.gmra.mrb[0].mxu0 %v280
    %v348 = vpop.f32.mrb[0].mxu0
    %v349 = vadd.f32 %v277, %v348
    %v350 = vpop.f32.mrb[0].mxu0
    %351 = vdwg.mxu0
    %v352 = vmul.f32 %v349, 0.5
    %v353 = vtanh.pop %v352
    %v354 = vadd.f32 %v353, 1.0
    %v355 = vmul.f32 %v354, 0.5
    %v356 = vtanh.pop %v349
    %v357 = vmul.f32 %v355, 0.0
    %359 = vrot.lane.b32.xlu0 %v356, 64
    %v360 = vpop.permute.xlu0 %359
    %v362 = vmul.f32 %v355, %v360
    %364 = vrot.lane.b32.xlu0 %v362, 32
    %v365 = vpop.permute.xlu0 %364
    %v367 = vadd.f32 %v357, %v365
    %v368 = vtanh.pop %v367
    %370 = vrot.lane.b32.xlu0 %v368, 64
    %v371 = vpop.permute.xlu0 %370
    %v373 = vmul.f32 %v355, %v371
    %375 = vrot.lane.b32.xlu0 %v373, 32
    %v376 = vpop.permute.xlu0 %375
    %378 = vst.msk [vmem:[#allocation3] sm:$0x1] %vm260, %v376
    %v379 = vld [vmem:[%s3] sm:$0xff]
    %v380 = vld [vmem:[%s3 + $0x8] sm:$0xff]
    %v381 = vld [vmem:[%s3 + $0x10] sm:$0xff]
    %v382 = vld [vmem:[%s3 + $0x18] sm:$0xff]
    %v383 = vsel %vm159, %v258, 0
    %385 = vmatprep.subr.mxu0 0.0
    %386 = vmatpush1.msra.mxu0 %v379
    %387 = vmatprep.subr.mxu0 0.0
    %388 = vmatpush1.msra.mxu0 %v380
    %389 = vmatprep.subr.mxu0 0.0
    %390 = vmatpush1.msra.mxu0 %v381
    %391 = vmatprep.subr.mxu0 0.0
    %392 = vmatpush1.msra.mxu0 %v382
    %393 = vmatprep.subr.mxu0 0.0
    %394 = vmatpush1.msra.mxu0 0.0
    %395 = vmatprep.subr.mxu0 0.0
    %396 = vmatpush1.msra.mxu0 0.0
    %397 = vmatprep.subr.mxu0 0.0
    %398 = vmatpush1.msra.mxu0 0.0
    %399 = vmatprep.subr.mxu0 0.0
    %400 = vmatpush1.msra.mxu0 0.0
    %401 = vmatprep.subr.mxu0 0.0
    %402 = vmatpush1.msra.mxu0 0.0
    %403 = vmatprep.subr.mxu0 0.0
    %404 = vmatpush1.msra.mxu0 0.0
    %405 = vmatprep.subr.mxu0 0.0
    %406 = vmatpush1.msra.mxu0 0.0
    %407 = vmatprep.subr.mxu0 0.0
    %408 = vmatpush1.msra.mxu0 0.0
    %409 = vmatprep.subr.mxu0 0.0
    %410 = vmatpush1.msra.mxu0 0.0
    %411 = vmatprep.subr.mxu0 0.0
    %412 = vmatpush1.msra.mxu0 0.0
    %413 = vmatprep.subr.mxu0 0.0
    %414 = vmatpush1.msra.mxu0 0.0
    %415 = vmatprep.subr.mxu0 0.0
    %416 = vmatpush1.msra.mxu0 0.0
    %417 = vmatprep.subr.mxu0 0.0
    %418 = vmatpush1.msra.mxu0 0.0
    %419 = vmatprep.subr.mxu0 0.0
    %420 = vmatpush1.msra.mxu0 0.0
    %421 = vmatprep.subr.mxu0 0.0
    %422 = vmatpush1.msra.mxu0 0.0
    %423 = vmatprep.subr.mxu0 0.0
    %424 = vmatpush1.msra.mxu0 0.0
    %425 = vmatprep.subr.mxu0 0.0
    %426 = vmatpush1.msra.mxu0 0.0
    %427 = vmatprep.subr.mxu0 0.0
    %428 = vmatpush1.msra.mxu0 0.0
    %429 = vmatprep.subr.mxu0 0.0
    %430 = vmatpush1.msra.mxu0 0.0
    %431 = vmatprep.subr.mxu0 0.0
    %432 = vmatpush1.msra.mxu0 0.0
    %433 = vmatprep.subr.mxu0 0.0
    %434 = vmatpush1.msra.mxu0 0.0
    %435 = vmatprep.subr.mxu0 0.0
    %436 = vmatpush1.msra.mxu0 0.0
    %437 = vmatprep.subr.mxu0 0.0
    %438 = vmatpush1.msra.mxu0 0.0
    %439 = vmatprep.subr.mxu0 0.0
    %440 = vmatpush1.msra.mxu0 0.0
    %441 = vmatprep.subr.mxu0 0.0
    %442 = vmatpush1.msra.mxu0 0.0
    %443 = vmatprep.subr.mxu0 0.0
    %444 = vmatpush1.msra.mxu0 0.0
    %445 = vmatprep.subr.mxu0 0.0
    %446 = vmatpush1.msra.mxu0 0.0
    %447 = vmatprep.subr.mxu0 0.0
    %448 = vmatpush1.msra.mxu0 0.0
    %449 = vmatprep.mubr.f32.mxu0 0.0
    %450 = vmatmul.mubr.f32.gmra.mrb[0].mxu0 %v383
    %v451 = vpop.f32.mrb[0].mxu0
    %v452 = vadd.f32 0.0, %v451
    %v453 = vpop.f32.mrb[0].mxu0
    %454 = vdwg.mxu0
    %v456 = vrot.slane %v452, 7
    %v458 = vadd.f32 %v150, %v456
    %v459 = vmul.f32 %v458, 0.5
    %v460 = vtanh.pop %v459
    %v461 = vadd.f32 %v460, 1.0
    %v462 = vmul.f32 %v461, 0.5
    %v463 = vtanh.pop %v458
    %v465 = vrot.slane %v249, 7
    %v467 = vmul.f32 %v462, %v465
    %469 = vrot.lane.b32.xlu0 %v463, 64
    %v470 = vpop.permute.xlu0 %469
    %v472 = vmul.f32 %v462, %v470
    %474 = vrot.lane.b32.xlu0 %v472, 32
    %v475 = vpop.permute.xlu0 %474
    %v477 = vadd.f32 %v467, %v475
    %v478 = vtanh.pop %v477
    %480 = vrot.lane.b32.xlu0 %v478, 64
    %v481 = vpop.permute.xlu0 %480
    %v483 = vmul.f32 %v462, %v481
    %485 = vrot.lane.b32.xlu0 %v483, 32
    %v486 = vpop.permute.xlu0 %485
    %vm488 = vcmask 254977
    %489 = vst.msk [vmem:[#allocation2 - $0x1] sm:$0x2] %vm488, %v486
    %490 = vrot.lane.b32.xlu0 %v373, 64
    %v491 = vpop.permute.xlu0 %490
    %493 = vst.msk [vmem:[#allocation2] sm:$0x1] %vm266, %v491
    %v494 = vld [vmem:[#allocation2] sm:$0x1]
    %v495 = vld [vmem:[#allocation7] sm:$0xff]
    %v496 = vld [vmem:[#allocation7 + $0x8] sm:$0xff]
    %v497 = vld [vmem:[#allocation7 + $0x10] sm:$0xff]
    %v498 = vld [vmem:[#allocation7 + $0x18] sm:$0xff]
    %v499 = vld [vmem:[#allocation7 + $0x20] sm:$0xff]
    %v500 = vld [vmem:[#allocation7 + $0x28] sm:$0xff]
    %v501 = vld [vmem:[#allocation7 + $0x30] sm:$0xff]
    %v502 = vld [vmem:[#allocation7 + $0x38] sm:$0xff]
    %v503 = vld [vmem:[#allocation9 + $0x1] sm:$0x1]
    %v505 = vsel %vm278, %v494, 0
    %507 = vmatprep.subr.mxu0 0.0
    %508 = vmatpush1.msra.mxu0 %v495
    %509 = vmatprep.subr.mxu0 0.0
    %510 = vmatpush1.msra.mxu0 %v496
    %511 = vmatprep.subr.mxu0 0.0
    %512 = vmatpush1.msra.mxu0 %v497
    %513 = vmatprep.subr.mxu0 0.0
    %514 = vmatpush1.msra.mxu0 %v498
    %515 = vmatprep.subr.mxu0 0.0
    %516 = vmatpush1.msra.mxu0 %v499
    %517 = vmatprep.subr.mxu0 0.0
    %518 = vmatpush1.msra.mxu0 %v500
    %519 = vmatprep.subr.mxu0 0.0
    %520 = vmatpush1.msra.mxu0 %v501
    %521 = vmatprep.subr.mxu0 0.0
    %522 = vmatpush1.msra.mxu0 %v502
    %523 = vmatprep.subr.mxu0 0.0
    %524 = vmatpush1.msra.mxu0 0.0
    %525 = vmatprep.subr.mxu0 0.0
    %526 = vmatpush1.msra.mxu0 0.0
    %527 = vmatprep.subr.mxu0 0.0
    %528 = vmatpush1.msra.mxu0 0.0
    %529 = vmatprep.subr.mxu0 0.0
    %530 = vmatpush1.msra.mxu0 0.0
    %531 = vmatprep.subr.mxu0 0.0
    %532 = vmatpush1.msra.mxu0 0.0
    %533 = vmatprep.subr.mxu0 0.0
    %534 = vmatpush1.msra.mxu0 0.0
    %535 = vmatprep.subr.mxu0 0.0
    %536 = vmatpush1.msra.mxu0 0.0
    %537 = vmatprep.subr.mxu0 0.0
    %538 = vmatpush1.msra.mxu0 0.0
    %539 = vmatprep.subr.mxu0 0.0
    %540 = vmatpush1.msra.mxu0 0.0
    %541 = vmatprep.subr.mxu0 0.0
    %542 = vmatpush1.msra.mxu0 0.0
    %543 = vmatprep.subr.mxu0 0.0
    %544 = vmatpush1.msra.mxu0 0.0
    %545 = vmatprep.subr.mxu0 0.0
    %546 = vmatpush1.msra.mxu0 0.0
    %547 = vmatprep.subr.mxu0 0.0
    %548 = vmatpush1.msra.mxu0 0.0
    %549 = vmatprep.subr.mxu0 0.0
    %550 = vmatpush1.msra.mxu0 0.0
    %551 = vmatprep.subr.mxu0 0.0
    %552 = vmatpush1.msra.mxu0 0.0
    %553 = vmatprep.subr.mxu0 0.0
    %554 = vmatpush1.msra.mxu0 0.0
    %555 = vmatprep.subr.mxu0 0.0
    %556 = vmatpush1.msra.mxu0 0.0
    %557 = vmatprep.subr.mxu0 0.0
    %558 = vmatpush1.msra.mxu0 0.0
    %559 = vmatprep.subr.mxu0 0.0
    %560 = vmatpush1.msra.mxu0 0.0
    %561 = vmatprep.subr.mxu0 0.0
    %562 = vmatpush1.msra.mxu0 0.0
    %563 = vmatprep.subr.mxu0 0.0
    %564 = vmatpush1.msra.mxu0 0.0
    %565 = vmatprep.subr.mxu0 0.0
    %566 = vmatpush1.msra.mxu0 0.0
    %567 = vmatprep.subr.mxu0 0.0
    %568 = vmatpush1.msra.mxu0 0.0
    %569 = vmatprep.subr.mxu0 0.0
    %570 = vmatpush1.msra.mxu0 0.0
    %571 = vmatprep.mubr.f32.mxu0 0.0
    %572 = vmatmul.mubr.f32.gmra.mrb[0].mxu0 %v505
    %v573 = vpop.f32.mrb[0].mxu0
    %v574 = vadd.f32 %v503, %v573
    %v575 = vpop.f32.mrb[0].mxu0
    %576 = vdwg.mxu0
    %v577 = vmul.f32 %v574, 0.5
    %v578 = vtanh.pop %v577
    %v579 = vadd.f32 %v578, 1.0
    %v580 = vmul.f32 %v579, 0.5
    %v581 = vtanh.pop %v574
    %v582 = vmul.f32 %v580, %v367
    %584 = vrot.lane.b32.xlu0 %v581, 64
    %v585 = vpop.permute.xlu0 %584
    %v587 = vmul.f32 %v580, %v585
    %589 = vrot.lane.b32.xlu0 %v587, 32
    %v590 = vpop.permute.xlu0 %589
    %v592 = vadd.f32 %v582, %v590
    %v593 = vtanh.pop %v592
    %595 = vrot.lane.b32.xlu0 %v593, 64
    %v596 = vpop.permute.xlu0 %595
    %v598 = vmul.f32 %v580, %v596
    %600 = vrot.lane.b32.xlu0 %v598, 32
    %v601 = vpop.permute.xlu0 %600
    %603 = vst.msk [vmem:[#allocation3 + $0x1] sm:$0x1] %vm260, %v601
    %v604 = vld [vmem:[%s3] sm:$0xff]
    %v605 = vld [vmem:[%s3 + $0x8] sm:$0xff]
    %v606 = vld [vmem:[%s3 + $0x10] sm:$0xff]
    %v607 = vld [vmem:[%s3 + $0x18] sm:$0xff]
    %v608 = vrot.slane %v483, 1
    %609 = vrot.lane.b32.xlu0 %v608, 32
    %v610 = vpop.permute.xlu0 %609
    %v611 = vsel %vm159, %v610, 0
    %613 = vmatprep.subr.mxu0 0.0
    %614 = vmatpush1.msra.mxu0 %v604
    %615 = vmatprep.subr.mxu0 0.0
    %616 = vmatpush1.msra.mxu0 %v605
    %617 = vmatprep.subr.mxu0 0.0
    %618 = vmatpush1.msra.mxu0 %v606
    %619 = vmatprep.subr.mxu0 0.0
    %620 = vmatpush1.msra.mxu0 %v607
    %621 = vmatprep.subr.mxu0 0.0
    %622 = vmatpush1.msra.mxu0 0.0
    %623 = vmatprep.subr.mxu0 0.0
    %624 = vmatpush1.msra.mxu0 0.0
    %625 = vmatprep.subr.mxu0 0.0
    %626 = vmatpush1.msra.mxu0 0.0
    %627 = vmatprep.subr.mxu0 0.0
    %628 = vmatpush1.msra.mxu0 0.0
    %629 = vmatprep.subr.mxu0 0.0
    %630 = vmatpush1.msra.mxu0 0.0
    %631 = vmatprep.subr.mxu0 0.0
    %632 = vmatpush1.msra.mxu0 0.0
    %633 = vmatprep.subr.mxu0 0.0
    %634 = vmatpush1.msra.mxu0 0.0
    %635 = vmatprep.subr.mxu0 0.0
    %636 = vmatpush1.msra.mxu0 0.0
    %637 = vmatprep.subr.mxu0 0.0
    %638 = vmatpush1.msra.mxu0 0.0
    %639 = vmatprep.subr.mxu0 0.0
    %640 = vmatpush1.msra.mxu0 0.0
    %641 = vmatprep.subr.mxu0 0.0
    %642 = vmatpush1.msra.mxu0 0.0
    %643 = vmatprep.subr.mxu0 0.0
    %644 = vmatpush1.msra.mxu0 0.0
    %645 = vmatprep.subr.mxu0 0.0
    %646 = vmatpush1.msra.mxu0 0.0
    %647 = vmatprep.subr.mxu0 0.0
    %648 = vmatpush1.msra.mxu0 0.0
    %649 = vmatprep.subr.mxu0 0.0
    %650 = vmatpush1.msra.mxu0 0.0
    %651 = vmatprep.subr.mxu0 0.0
    %652 = vmatpush1.msra.mxu0 0.0
    %653 = vmatprep.subr.mxu0 0.0
    %654 = vmatpush1.msra.mxu0 0.0
    %655 = vmatprep.subr.mxu0 0.0
    %656 = vmatpush1.msra.mxu0 0.0
    %657 = vmatprep.subr.mxu0 0.0
    %658 = vmatpush1.msra.mxu0 0.0
    %659 = vmatprep.subr.mxu0 0.0
    %660 = vmatpush1.msra.mxu0 0.0
    %661 = vmatprep.subr.mxu0 0.0
    %662 = vmatpush1.msra.mxu0 0.0
    %663 = vmatprep.subr.mxu0 0.0
    %664 = vmatpush1.msra.mxu0 0.0
    %665 = vmatprep.subr.mxu0 0.0
    %666 = vmatpush1.msra.mxu0 0.0
    %667 = vmatprep.subr.mxu0 0.0
    %668 = vmatpush1.msra.mxu0 0.0
    %669 = vmatprep.subr.mxu0 0.0
    %670 = vmatpush1.msra.mxu0 0.0
    %671 = vmatprep.subr.mxu0 0.0
    %672 = vmatpush1.msra.mxu0 0.0
    %673 = vmatprep.subr.mxu0 0.0
    %674 = vmatpush1.msra.mxu0 0.0
    %675 = vmatprep.subr.mxu0 0.0
    %676 = vmatpush1.msra.mxu0 0.0
    %677 = vmatprep.mubr.f32.mxu0 0.0
    %678 = vmatmul.mubr.f32.gmra.mrb[0].mxu0 %v611
    %v679 = vpop.f32.mrb[0].mxu0
    %v680 = vadd.f32 0.0, %v679
    %v681 = vpop.f32.mrb[0].mxu0
    %682 = vdwg.mxu0
    %v684 = vrot.slane %v680, 6
    %v686 = vadd.f32 %v150, %v684
    %v687 = vmul.f32 %v686, 0.5
    %v688 = vtanh.pop %v687
    %v689 = vadd.f32 %v688, 1.0
    %v690 = vmul.f32 %v689, 0.5
    %v691 = vtanh.pop %v686
    %v693 = vrot.slane %v477, 7
    %v695 = vmul.f32 %v690, %v693
    %697 = vrot.lane.b32.xlu0 %v691, 64
    %v698 = vpop.permute.xlu0 %697
    %v700 = vmul.f32 %v690, %v698
    %702 = vrot.lane.b32.xlu0 %v700, 32
    %v703 = vpop.permute.xlu0 %702
    %v705 = vadd.f32 %v695, %v703
    %v706 = vtanh.pop %v705
    %708 = vrot.lane.b32.xlu0 %v706, 64
    %v709 = vpop.permute.xlu0 %708
    %v711 = vmul.f32 %v690, %v709
    %713 = vrot.lane.b32.xlu0 %v711, 32
    %v714 = vpop.permute.xlu0 %713
    %vm716 = vcmask 256002
    %717 = vst.msk [vmem:[#allocation2 - $0x2] sm:$0x4] %vm716, %v714
    %718 = vrot.lane.b32.xlu0 %v598, 64
    %v719 = vpop.permute.xlu0 %718
    %721 = vst.msk [vmem:[#allocation2] sm:$0x1] %vm266, %v719
    %v722 = vld [vmem:[#allocation2] sm:$0x1]
    %v723 = vld [vmem:[#allocation7] sm:$0xff]
    %v724 = vld [vmem:[#allocation7 + $0x8] sm:$0xff]
    %v725 = vld [vmem:[#allocation7 + $0x10] sm:$0xff]
    %v726 = vld [vmem:[#allocation7 + $0x18] sm:$0xff]
    %v727 = vld [vmem:[#allocation7 + $0x20] sm:$0xff]
    %v728 = vld [vmem:[#allocation7 + $0x28] sm:$0xff]
    %v729 = vld [vmem:[#allocation7 + $0x30] sm:$0xff]
    %v730 = vld [vmem:[#allocation7 + $0x38] sm:$0xff]
    %v731 = vld [vmem:[#allocation9 + $0x1] sm:$0x1]
    %v733 = vsel %vm278, %v722, 0
    %735 = vmatprep.subr.mxu0 0.0
    %736 = vmatpush1.msra.mxu0 %v723
    %737 = vmatprep.subr.mxu0 0.0
    %738 = vmatpush1.msra.mxu0 %v724
    %739 = vmatprep.subr.mxu0 0.0
    %740 = vmatpush1.msra.mxu0 %v725
    %741 = vmatprep.subr.mxu0 0.0
    %742 = vmatpush1.msra.mxu0 %v726
    %743 = vmatprep.subr.mxu0 0.0
    %744 = vmatpush1.msra.mxu0 %v727
    %745 = vmatprep.subr.mxu0 0.0
    %746 = vmatpush1.msra.mxu0 %v728
    %747 = vmatprep.subr.mxu0 0.0
    %748 = vmatpush1.msra.mxu0 %v729
    %749 = vmatprep.subr.mxu0 0.0
    %750 = vmatpush1.msra.mxu0 %v730
    %751 = vmatprep.subr.mxu0 0.0
    %752 = vmatpush1.msra.mxu0 0.0
    %753 = vmatprep.subr.mxu0 0.0
    %754 = vmatpush1.msra.mxu0 0.0
    %755 = vmatprep.subr.mxu0 0.0
    %756 = vmatpush1.msra.mxu0 0.0
    %757 = vmatprep.subr.mxu0 0.0
    %758 = vmatpush1.msra.mxu0 0.0
    %759 = vmatprep.subr.mxu0 0.0
    %760 = vmatpush1.msra.mxu0 0.0
    %761 = vmatprep.subr.mxu0 0.0
    %762 = vmatpush1.msra.mxu0 0.0
    %763 = vmatprep.subr.mxu0 0.0
    %764 = vmatpush1.msra.mxu0 0.0
    %765 = vmatprep.subr.mxu0 0.0
    %766 = vmatpush1.msra.mxu0 0.0
    %767 = vmatprep.subr.mxu0 0.0
    %768 = vmatpush1.msra.mxu0 0.0
    %769 = vmatprep.subr.mxu0 0.0
    %770 = vmatpush1.msra.mxu0 0.0
    %771 = vmatprep.subr.mxu0 0.0
    %772 = vmatpush1.msra.mxu0 0.0
    %773 = vmatprep.subr.mxu0 0.0
    %774 = vmatpush1.msra.mxu0 0.0
    %775 = vmatprep.subr.mxu0 0.0
    %776 = vmatpush1.msra.mxu0 0.0
    %777 = vmatprep.subr.mxu0 0.0
    %778 = vmatpush1.msra.mxu0 0.0
    %779 = vmatprep.subr.mxu0 0.0
    %780 = vmatpush1.msra.mxu0 0.0
    %781 = vmatprep.subr.mxu0 0.0
    %782 = vmatpush1.msra.mxu0 0.0
    %783 = vmatprep.subr.mxu0 0.0
    %784 = vmatpush1.msra.mxu0 0.0
    %785 = vmatprep.subr.mxu0 0.0
    %786 = vmatpush1.msra.mxu0 0.0
    %787 = vmatprep.subr.mxu0 0.0
    %788 = vmatpush1.msra.mxu0 0.0
    %789 = vmatprep.subr.mxu0 0.0
    %790 = vmatpush1.msra.mxu0 0.0
    %791 = vmatprep.subr.mxu0 0.0
    %792 = vmatpush1.msra.mxu0 0.0
    %793 = vmatprep.subr.mxu0 0.0
    %794 = vmatpush1.msra.mxu0 0.0
    %795 = vmatprep.subr.mxu0 0.0
    %796 = vmatpush1.msra.mxu0 0.0
    %797 = vmatprep.subr.mxu0 0.0
    %798 = vmatpush1.msra.mxu0 0.0
    %799 = vmatprep.mubr.f32.mxu0 0.0
    %800 = vmatmul.mubr.f32.gmra.mrb[0].mxu0 %v733
    %v801 = vpop.f32.mrb[0].mxu0
    %v802 = vadd.f32 %v731, %v801
    %v803 = vpop.f32.mrb[0].mxu0
    %804 = vdwg.mxu0
    %v805 = vmul.f32 %v802, 0.5
    %v806 = vtanh.pop %v805
    %v807 = vadd.f32 %v806, 1.0
    %v808 = vmul.f32 %v807, 0.5
    %v809 = vtanh.pop %v802
    %v810 = vmul.f32 %v808, %v592
    %812 = vrot.lane.b32.xlu0 %v809, 64
    %v813 = vpop.permute.xlu0 %812
    %v815 = vmul.f32 %v808, %v813
    %817 = vrot.lane.b32.xlu0 %v815, 32
    %v818 = vpop.permute.xlu0 %817
    %v820 = vadd.f32 %v810, %v818
    %v821 = vtanh.pop %v820
    %823 = vrot.lane.b32.xlu0 %v821, 64
    %v824 = vpop.permute.xlu0 %823
    %v826 = vmul.f32 %v808, %v824
    %828 = vrot.lane.b32.xlu0 %v826, 32
    %v829 = vpop.permute.xlu0 %828
    %831 = vst.msk [vmem:[#allocation3 + $0x2] sm:$0x1] %vm260, %v829
    %v832 = vld [vmem:[%s3] sm:$0xff]
    %v833 = vld [vmem:[%s3 + $0x8] sm:$0xff]
    %v834 = vld [vmem:[%s3 + $0x10] sm:$0xff]
    %v835 = vld [vmem:[%s3 + $0x18] sm:$0xff]
    %v836 = vrot.slane %v711, 2
    %837 = vrot.lane.b32.xlu0 %v836, 32
    %v838 = vpop.permute.xlu0 %837
    %v839 = vsel %vm159, %v838, 0
    %841 = vmatprep.subr.mxu0 0.0
    %842 = vmatpush1.msra.mxu0 %v832
    %843 = vmatprep.subr.mxu0 0.0
    %844 = vmatpush1.msra.mxu0 %v833
    %845 = vmatprep.subr.mxu0 0.0
    %846 = vmatpush1.msra.mxu0 %v834
    %847 = vmatprep.subr.mxu0 0.0
    %848 = vmatpush1.msra.mxu0 %v835
    %849 = vmatprep.subr.mxu0 0.0
    %850 = vmatpush1.msra.mxu0 0.0
    %851 = vmatprep.subr.mxu0 0.0
    %852 = vmatpush1.msra.mxu0 0.0
    %853 = vmatprep.subr.mxu0 0.0
    %854 = vmatpush1.msra.mxu0 0.0
    %855 = vmatprep.subr.mxu0 0.0
    %856 = vmatpush1.msra.mxu0 0.0
    %857 = vmatprep.subr.mxu0 0.0
    %858 = vmatpush1.msra.mxu0 0.0
    %859 = vmatprep.subr.mxu0 0.0
    %860 = vmatpush1.msra.mxu0 0.0
    %861 = vmatprep.subr.mxu0 0.0
    %862 = vmatpush1.msra.mxu0 0.0
    %863 = vmatprep.subr.mxu0 0.0
    %864 = vmatpush1.msra.mxu0 0.0
    %865 = vmatprep.subr.mxu0 0.0
    %866 = vmatpush1.msra.mxu0 0.0
    %867 = vmatprep.subr.mxu0 0.0
    %868 = vmatpush1.msra.mxu0 0.0
    %869 = vmatprep.subr.mxu0 0.0
    %870 = vmatpush1.msra.mxu0 0.0
    %871 = vmatprep.subr.mxu0 0.0
    %872 = vmatpush1.msra.mxu0 0.0
    %873 = vmatprep.subr.mxu0 0.0
    %874 = vmatpush1.msra.mxu0 0.0
    %875 = vmatprep.subr.mxu0 0.0
    %876 = vmatpush1.msra.mxu0 0.0
    %877 = vmatprep.subr.mxu0 0.0
    %878 = vmatpush1.msra.mxu0 0.0
    %879 = vmatprep.subr.mxu0 0.0
    %880 = vmatpush1.msra.mxu0 0.0
    %881 = vmatprep.subr.mxu0 0.0
    %882 = vmatpush1.msra.mxu0 0.0
    %883 = vmatprep.subr.mxu0 0.0
    %884 = vmatpush1.msra.mxu0 0.0
    %885 = vmatprep.subr.mxu0 0.0
    %886 = vmatpush1.msra.mxu0 0.0
    %887 = vmatprep.subr.mxu0 0.0
    %888 = vmatpush1.msra.mxu0 0.0
    %889 = vmatprep.subr.mxu0 0.0
    %890 = vmatpush1.msra.mxu0 0.0
    %891 = vmatprep.subr.mxu0 0.0
    %892 = vmatpush1.msra.mxu0 0.0
    %893 = vmatprep.subr.mxu0 0.0
    %894 = vmatpush1.msra.mxu0 0.0
    %895 = vmatprep.subr.mxu0 0.0
    %896 = vmatpush1.msra.mxu0 0.0
    %897 = vmatprep.subr.mxu0 0.0
    %898 = vmatpush1.msra.mxu0 0.0
    %899 = vmatprep.subr.mxu0 0.0
    %900 = vmatpush1.msra.mxu0 0.0
    %901 = vmatprep.subr.mxu0 0.0
    %902 = vmatpush1.msra.mxu0 0.0
    %903 = vmatprep.subr.mxu0 0.0
    %904 = vmatpush1.msra.mxu0 0.0
    %905 = vmatprep.mubr.f32.mxu0 0.0
    %906 = vmatmul.mubr.f32.gmra.mrb[0].mxu0 %v839
    %v907 = vpop.f32.mrb[0].mxu0
    %v908 = vadd.f32 0.0, %v907
    %v909 = vpop.f32.mrb[0].mxu0
    %910 = vdwg.mxu0
    %v912 = vrot.slane %v908, 5
    %v914 = vadd.f32 %v150, %v912
    %v915 = vmul.f32 %v914, 0.5
    %v916 = vtanh.pop %v915
    %v917 = vadd.f32 %v916, 1.0
    %v918 = vmul.f32 %v917, 0.5
    %v919 = vtanh.pop %v914
    %v921 = vrot.slane %v705, 7
    %v923 = vmul.f32 %v918, %v921
    %925 = vrot.lane.b32.xlu0 %v919, 64
    %v926 = vpop.permute.xlu0 %925
    %v928 = vmul.f32 %v918, %v926
    %930 = vrot.lane.b32.xlu0 %v928, 32
    %v931 = vpop.permute.xlu0 %930
    %v933 = vadd.f32 %v923, %v931
    %v934 = vtanh.pop %v933
    %936 = vrot.lane.b32.xlu0 %v934, 64
    %v937 = vpop.permute.xlu0 %936
    %v939 = vmul.f32 %v918, %v937
    %941 = vrot.lane.b32.xlu0 %v939, 32
    %v942 = vpop.permute.xlu0 %941
    %vm944 = vcmask 257027
    %945 = vst.msk [vmem:[#allocation2 - $0x3] sm:$0x8] %vm944, %v942
    %946 = vrot.lane.b32.xlu0 %v826, 64
    %v947 = vpop.permute.xlu0 %946
    %949 = vst.msk [vmem:[#allocation2] sm:$0x1] %vm266, %v947
    %v950 = vld [vmem:[#allocation2] sm:$0x1]
    %v951 = vld [vmem:[#allocation7] sm:$0xff]
    %v952 = vld [vmem:[#allocation7 + $0x8] sm:$0xff]
    %v953 = vld [vmem:[#allocation7 + $0x10] sm:$0xff]
    %v954 = vld [vmem:[#allocation7 + $0x18] sm:$0xff]
    %v955 = vld [vmem:[#allocation7 + $0x20] sm:$0xff]
    %v956 = vld [vmem:[#allocation7 + $0x28] sm:$0xff]
    %v957 = vld [vmem:[#allocation7 + $0x30] sm:$0xff]
    %v958 = vld [vmem:[#allocation7 + $0x38] sm:$0xff]
    %v959 = vld [vmem:[#allocation9 + $0x1] sm:$0x1]
    %v961 = vsel %vm278, %v950, 0
    %963 = vmatprep.subr.mxu0 0.0
    %964 = vmatpush1.msra.mxu0 %v951
    %965 = vmatprep.subr.mxu0 0.0
    %966 = vmatpush1.msra.mxu0 %v952
    %967 = vmatprep.subr.mxu0 0.0
    %968 = vmatpush1.msra.mxu0 %v953
    %969 = vmatprep.subr.mxu0 0.0
    %970 = vmatpush1.msra.mxu0 %v954
    %971 = vmatprep.subr.mxu0 0.0
    %972 = vmatpush1.msra.mxu0 %v955
    %973 = vmatprep.subr.mxu0 0.0
    %974 = vmatpush1.msra.mxu0 %v956
    %975 = vmatprep.subr.mxu0 0.0
    %976 = vmatpush1.msra.mxu0 %v957
    %977 = vmatprep.subr.mxu0 0.0
    %978 = vmatpush1.msra.mxu0 %v958
    %979 = vmatprep.subr.mxu0 0.0
    %980 = vmatpush1.msra.mxu0 0.0
    %981 = vmatprep.subr.mxu0 0.0
    %982 = vmatpush1.msra.mxu0 0.0
    %983 = vmatprep.subr.mxu0 0.0
    %984 = vmatpush1.msra.mxu0 0.0
    %985 = vmatprep.subr.mxu0 0.0
    %986 = vmatpush1.msra.mxu0 0.0
    %987 = vmatprep.subr.mxu0 0.0
    %988 = vmatpush1.msra.mxu0 0.0
    %989 = vmatprep.subr.mxu0 0.0
    %990 = vmatpush1.msra.mxu0 0.0
    %991 = vmatprep.subr.mxu0 0.0
    %992 = vmatpush1.msra.mxu0 0.0
    %993 = vmatprep.subr.mxu0 0.0
    %994 = vmatpush1.msra.mxu0 0.0
    %995 = vmatprep.subr.mxu0 0.0
    %996 = vmatpush1.msra.mxu0 0.0
    %997 = vmatprep.subr.mxu0 0.0
    %998 = vmatpush1.msra.mxu0 0.0
    %999 = vmatprep.subr.mxu0 0.0
    %1000 = vmatpush1.msra.mxu0 0.0
    %1001 = vmatprep.subr.mxu0 0.0
    %1002 = vmatpush1.msra.mxu0 0.0
    %1003 = vmatprep.subr.mxu0 0.0
    %1004 = vmatpush1.msra.mxu0 0.0
    %1005 = vmatprep.subr.mxu0 0.0
    %1006 = vmatpush1.msra.mxu0 0.0
    %1007 = vmatprep.subr.mxu0 0.0
    %1008 = vmatpush1.msra.mxu0 0.0
    %1009 = vmatprep.subr.mxu0 0.0
    %1010 = vmatpush1.msra.mxu0 0.0
    %1011 = vmatprep.subr.mxu0 0.0
    %1012 = vmatpush1.msra.mxu0 0.0
    %1013 = vmatprep.subr.mxu0 0.0
    %1014 = vmatpush1.msra.mxu0 0.0
    %1015 = vmatprep.subr.mxu0 0.0
    %1016 = vmatpush1.msra.mxu0 0.0
    %1017 = vmatprep.subr.mxu0 0.0
    %1018 = vmatpush1.msra.mxu0 0.0
    %1019 = vmatprep.subr.mxu0 0.0
    %1020 = vmatpush1.msra.mxu0 0.0
    %1021 = vmatprep.subr.mxu0 0.0
    %1022 = vmatpush1.msra.mxu0 0.0
    %1023 = vmatprep.subr.mxu0 0.0
    %1024 = vmatpush1.msra.mxu0 0.0
    %1025 = vmatprep.subr.mxu0 0.0
    %1026 = vmatpush1.msra.mxu0 0.0
    %1027 = vmatprep.mubr.f32.mxu0 0.0
    %1028 = vmatmul.mubr.f32.gmra.mrb[0].mxu0 %v961
    %v1029 = vpop.f32.mrb[0].mxu0
    %v1030 = vadd.f32 %v959, %v1029
    %v1031 = vpop.f32.mrb[0].mxu0
    %1032 = vdwg.mxu0
    %v1033 = vmul.f32 %v1030, 0.5
    %v1034 = vtanh.pop %v1033
    %v1035 = vadd.f32 %v1034, 1.0
    %v1036 = vmul.f32 %v1035, 0.5
    %v1037 = vtanh.pop %v1030
    %v1038 = vmul.f32 %v1036, %v820
    %1040 = vrot.lane.b32.xlu0 %v1037, 64
    %v1041 = vpop.permute.xlu0 %1040
    %v1043 = vmul.f32 %v1036, %v1041
    %1045 = vrot.lane.b32.xlu0 %v1043, 32
    %v1046 = vpop.permute.xlu0 %1045
    %v1048 = vadd.f32 %v1038, %v1046
    %v1049 = vtanh.pop %v1048
    %1051 = vrot.lane.b32.xlu0 %v1049, 64
    %v1052 = vpop.permute.xlu0 %1051
    %v1054 = vmul.f32 %v1036, %v1052
    %1056 = vrot.lane.b32.xlu0 %v1054, 32
    %v1057 = vpop.permute.xlu0 %1056
    %1059 = vst.msk [vmem:[#allocation3 + $0x3] sm:$0x1] %vm260, %v1057
    %v1060 = vld [vmem:[%s3] sm:$0xff]
    %v1061 = vld [vmem:[%s3 + $0x8] sm:$0xff]
    %v1062 = vld [vmem:[%s3 + $0x10] sm:$0xff]
    %v1063 = vld [vmem:[%s3 + $0x18] sm:$0xff]
    %v1064 = vrot.slane %v939, 3
    %1065 = vrot.lane.b32.xlu0 %v1064, 32
    %v1066 = vpop.permute.xlu0 %1065
    %v1067 = vsel %vm159, %v1066, 0
    %1069 = vmatprep.subr.mxu0 0.0
    %1070 = vmatpush1.msra.mxu0 %v1060
    %1071 = vmatprep.subr.mxu0 0.0
    %1072 = vmatpush1.msra.mxu0 %v1061
    %1073 = vmatprep.subr.mxu0 0.0
    %1074 = vmatpush1.msra.mxu0 %v1062
    %1075 = vmatprep.subr.mxu0 0.0
    %1076 = vmatpush1.msra.mxu0 %v1063
    %1077 = vmatprep.subr.mxu0 0.0
    %1078 = vmatpush1.msra.mxu0 0.0
    %1079 = vmatprep.subr.mxu0 0.0
    %1080 = vmatpush1.msra.mxu0 0.0
    %1081 = vmatprep.subr.mxu0 0.0
    %1082 = vmatpush1.msra.mxu0 0.0
    %1083 = vmatprep.subr.mxu0 0.0
    %1084 = vmatpush1.msra.mxu0 0.0
    %1085 = vmatprep.subr.mxu0 0.0
    %1086 = vmatpush1.msra.mxu0 0.0
    %1087 = vmatprep.subr.mxu0 0.0
    %1088 = vmatpush1.msra.mxu0 0.0
    %1089 = vmatprep.subr.mxu0 0.0
    %1090 = vmatpush1.msra.mxu0 0.0
    %1091 = vmatprep.subr.mxu0 0.0
    %1092 = vmatpush1.msra.mxu0 0.0
    %1093 = vmatprep.subr.mxu0 0.0
    %1094 = vmatpush1.msra.mxu0 0.0
    %1095 = vmatprep.subr.mxu0 0.0
    %1096 = vmatpush1.msra.mxu0 0.0
    %1097 = vmatprep.subr.mxu0 0.0
    %1098 = vmatpush1.msra.mxu0 0.0
    %1099 = vmatprep.subr.mxu0 0.0
    %1100 = vmatpush1.msra.mxu0 0.0
    %1101 = vmatprep.subr.mxu0 0.0
    %1102 = vmatpush1.msra.mxu0 0.0
    %1103 = vmatprep.subr.mxu0 0.0
    %1104 = vmatpush1.msra.mxu0 0.0
    %1105 = vmatprep.subr.mxu0 0.0
    %1106 = vmatpush1.msra.mxu0 0.0
    %1107 = vmatprep.subr.mxu0 0.0
    %1108 = vmatpush1.msra.mxu0 0.0
    %1109 = vmatprep.subr.mxu0 0.0
    %1110 = vmatpush1.msra.mxu0 0.0
    %1111 = vmatprep.subr.mxu0 0.0
    %1112 = vmatpush1.msra.mxu0 0.0
    %1113 = vmatprep.subr.mxu0 0.0
    %1114 = vmatpush1.msra.mxu0 0.0
    %1115 = vmatprep.subr.mxu0 0.0
    %1116 = vmatpush1.msra.mxu0 0.0
    %1117 = vmatprep.subr.mxu0 0.0
    %1118 = vmatpush1.msra.mxu0 0.0
    %1119 = vmatprep.subr.mxu0 0.0
    %1120 = vmatpush1.msra.mxu0 0.0
    %1121 = vmatprep.subr.mxu0 0.0
    %1122 = vmatpush1.msra.mxu0 0.0
    %1123 = vmatprep.subr.mxu0 0.0
    %1124 = vmatpush1.msra.mxu0 0.0
    %1125 = vmatprep.subr.mxu0 0.0
    %1126 = vmatpush1.msra.mxu0 0.0
    %1127 = vmatprep.subr.mxu0 0.0
    %1128 = vmatpush1.msra.mxu0 0.0
    %1129 = vmatprep.subr.mxu0 0.0
    %1130 = vmatpush1.msra.mxu0 0.0
    %1131 = vmatprep.subr.mxu0 0.0
    %1132 = vmatpush1.msra.mxu0 0.0
    %1133 = vmatprep.mubr.f32.mxu0 0.0
    %1134 = vmatmul.mubr.f32.gmra.mrb[0].mxu0 %v1067
    %v1135 = vpop.f32.mrb[0].mxu0
    %v1136 = vadd.f32 0.0, %v1135
    %v1137 = vpop.f32.mrb[0].mxu0
    %1138 = vdwg.mxu0
    %v1140 = vrot.slane %v1136, 4
    %v1142 = vadd.f32 %v150, %v1140
    %v1143 = vmul.f32 %v1142, 0.5
    %v1144 = vtanh.pop %v1143
    %v1145 = vadd.f32 %v1144, 1.0
    %v1146 = vmul.f32 %v1145, 0.5
    %v1147 = vtanh.pop %v1142
    %v1149 = vrot.slane %v933, 7
    %v1151 = vmul.f32 %v1146, %v1149
    %1153 = vrot.lane.b32.xlu0 %v1147, 64
    %v1154 = vpop.permute.xlu0 %1153
    %v1156 = vmul.f32 %v1146, %v1154
    %1158 = vrot.lane.b32.xlu0 %v1156, 32
    %v1159 = vpop.permute.xlu0 %1158
    %v1161 = vadd.f32 %v1151, %v1159
    %v1162 = vtanh.pop %v1161
    %1164 = vrot.lane.b32.xlu0 %v1162, 64
    %v1165 = vpop.permute.xlu0 %1164
    %v1167 = vmul.f32 %v1146, %v1165
    %1169 = vrot.lane.b32.xlu0 %v1167, 32
    %v1170 = vpop.permute.xlu0 %1169
    %vm1172 = vcmask 258052
    %1173 = vst.msk [vmem:[#allocation2 - $0x4] sm:$0x10] %vm1172, %v1170
    %1174 = vrot.lane.b32.xlu0 %v1054, 64
    %v1175 = vpop.permute.xlu0 %1174
    %1177 = vst.msk [vmem:[#allocation2] sm:$0x1] %vm266, %v1175
    %v1178 = vld [vmem:[#allocation2] sm:$0x1]
    %v1179 = vld [vmem:[#allocation7] sm:$0xff]
    %v1180 = vld [vmem:[#allocation7 + $0x8] sm:$0xff]
    %v1181 = vld [vmem:[#allocation7 + $0x10] sm:$0xff]
    %v1182 = vld [vmem:[#allocation7 + $0x18] sm:$0xff]
    %v1183 = vld [vmem:[#allocation7 + $0x20] sm:$0xff]
    %v1184 = vld [vmem:[#allocation7 + $0x28] sm:$0xff]
    %v1185 = vld [vmem:[#allocation7 + $0x30] sm:$0xff]
    %v1186 = vld [vmem:[#allocation7 + $0x38] sm:$0xff]
    %v1187 = vld [vmem:[#allocation9 + $0x1] sm:$0x1]
    %v1189 = vsel %vm278, %v1178, 0
    %1191 = vmatprep.subr.mxu0 0.0
    %1192 = vmatpush1.msra.mxu0 %v1179
    %1193 = vmatprep.subr.mxu0 0.0
    %1194 = vmatpush1.msra.mxu0 %v1180
    %1195 = vmatprep.subr.mxu0 0.0
    %1196 = vmatpush1.msra.mxu0 %v1181
    %1197 = vmatprep.subr.mxu0 0.0
    %1198 = vmatpush1.msra.mxu0 %v1182
    %1199 = vmatprep.subr.mxu0 0.0
    %1200 = vmatpush1.msra.mxu0 %v1183
    %1201 = vmatprep.subr.mxu0 0.0
    %1202 = vmatpush1.msra.mxu0 %v1184
    %1203 = vmatprep.subr.mxu0 0.0
    %1204 = vmatpush1.msra.mxu0 %v1185
    %1205 = vmatprep.subr.mxu0 0.0
    %1206 = vmatpush1.msra.mxu0 %v1186
    %1207 = vmatprep.subr.mxu0 0.0
    %1208 = vmatpush1.msra.mxu0 0.0
    %1209 = vmatprep.subr.mxu0 0.0
    %1210 = vmatpush1.msra.mxu0 0.0
    %1211 = vmatprep.subr.mxu0 0.0
    %1212 = vmatpush1.msra.mxu0 0.0
    %1213 = vmatprep.subr.mxu0 0.0
    %1214 = vmatpush1.msra.mxu0 0.0
    %1215 = vmatprep.subr.mxu0 0.0
    %1216 = vmatpush1.msra.mxu0 0.0
    %1217 = vmatprep.subr.mxu0 0.0
    %1218 = vmatpush1.msra.mxu0 0.0
    %1219 = vmatprep.subr.mxu0 0.0
    %1220 = vmatpush1.msra.mxu0 0.0
    %1221 = vmatprep.subr.mxu0 0.0
    %1222 = vmatpush1.msra.mxu0 0.0
    %1223 = vmatprep.subr.mxu0 0.0
    %1224 = vmatpush1.msra.mxu0 0.0
    %1225 = vmatprep.subr.mxu0 0.0
    %1226 = vmatpush1.msra.mxu0 0.0
    %1227 = vmatprep.subr.mxu0 0.0
    %1228 = vmatpush1.msra.mxu0 0.0
    %1229 = vmatprep.subr.mxu0 0.0
    %1230 = vmatpush1.msra.mxu0 0.0
    %1231 = vmatprep.subr.mxu0 0.0
    %1232 = vmatpush1.msra.mxu0 0.0
    %1233 = vmatprep.subr.mxu0 0.0
    %1234 = vmatpush1.msra.mxu0 0.0
    %1235 = vmatprep.subr.mxu0 0.0
    %1236 = vmatpush1.msra.mxu0 0.0
    %1237 = vmatprep.subr.mxu0 0.0
    %1238 = vmatpush1.msra.mxu0 0.0
    %1239 = vmatprep.subr.mxu0 0.0
    %1240 = vmatpush1.msra.mxu0 0.0
    %1241 = vmatprep.subr.mxu0 0.0
    %1242 = vmatpush1.msra.mxu0 0.0
    %1243 = vmatprep.subr.mxu0 0.0
    %1244 = vmatpush1.msra.mxu0 0.0
    %1245 = vmatprep.subr.mxu0 0.0
    %1246 = vmatpush1.msra.mxu0 0.0
    %1247 = vmatprep.subr.mxu0 0.0
    %1248 = vmatpush1.msra.mxu0 0.0
    %1249 = vmatprep.subr.mxu0 0.0
    %1250 = vmatpush1.msra.mxu0 0.0
    %1251 = vmatprep.subr.mxu0 0.0
    %1252 = vmatpush1.msra.mxu0 0.0
    %1253 = vmatprep.subr.mxu0 0.0
    %1254 = vmatpush1.msra.mxu0 0.0
    %1255 = vmatprep.mubr.f32.mxu0 0.0
    %1256 = vmatmul.mubr.f32.gmra.mrb[0].mxu0 %v1189
    %v1257 = vpop.f32.mrb[0].mxu0
    %v1258 = vadd.f32 %v1187, %v1257
    %v1259 = vpop.f32.mrb[0].mxu0
    %1260 = vdwg.mxu0
    %v1261 = vmul.f32 %v1258, 0.5
    %v1262 = vtanh.pop %v1261
    %v1263 = vadd.f32 %v1262, 1.0
    %v1264 = vmul.f32 %v1263, 0.5
    %v1265 = vtanh.pop %v1258
    %v1266 = vmul.f32 %v1264, %v1048
    %1268 = vrot.lane.b32.xlu0 %v1265, 64
    %v1269 = vpop.permute.xlu0 %1268
    %v1271 = vmul.f32 %v1264, %v1269
    %1273 = vrot.lane.b32.xlu0 %v1271, 32
    %v1274 = vpop.permute.xlu0 %1273
    %v1276 = vadd.f32 %v1266, %v1274
    %v1277 = vtanh.pop %v1276
    %1279 = vrot.lane.b32.xlu0 %v1277, 64
    %v1280 = vpop.permute.xlu0 %1279
    %v1282 = vmul.f32 %v1264, %v1280
    %1284 = vrot.lane.b32.xlu0 %v1282, 32
    %v1285 = vpop.permute.xlu0 %1284
    %1287 = vst.msk [vmem:[#allocation3 + $0x4] sm:$0x1] %vm260, %v1285
    %v1288 = vld [vmem:[%s3] sm:$0xff]
    %v1289 = vld [vmem:[%s3 + $0x8] sm:$0xff]
    %v1290 = vld [vmem:[%s3 + $0x10] sm:$0xff]
    %v1291 = vld [vmem:[%s3 + $0x18] sm:$0xff]
    %v1292 = vrot.slane %v1167, 4
    %1293 = vrot.lane.b32.xlu0 %v1292, 32
    %v1294 = vpop.permute.xlu0 %1293
    %v1295 = vsel %vm159, %v1294, 0
    %1297 = vmatprep.subr.mxu0 0.0
    %1298 = vmatpush1.msra.mxu0 %v1288
    %1299 = vmatprep.subr.mxu0 0.0
    %1300 = vmatpush1.msra.mxu0 %v1289
    %1301 = vmatprep.subr.mxu0 0.0
    %1302 = vmatpush1.msra.mxu0 %v1290
    %1303 = vmatprep.subr.mxu0 0.0
    %1304 = vmatpush1.msra.mxu0 %v1291
    %1305 = vmatprep.subr.mxu0 0.0
    %1306 = vmatpush1.msra.mxu0 0.0
    %1307 = vmatprep.subr.mxu0 0.0
    %1308 = vmatpush1.msra.mxu0 0.0
    %1309 = vmatprep.subr.mxu0 0.0
    %1310 = vmatpush1.msra.mxu0 0.0
    %1311 = vmatprep.subr.mxu0 0.0
    %1312 = vmatpush1.msra.mxu0 0.0
    %1313 = vmatprep.subr.mxu0 0.0
    %1314 = vmatpush1.msra.mxu0 0.0
    %1315 = vmatprep.subr.mxu0 0.0
    %1316 = vmatpush1.msra.mxu0 0.0
    %1317 = vmatprep.subr.mxu0 0.0
    %1318 = vmatpush1.msra.mxu0 0.0
    %1319 = vmatprep.subr.mxu0 0.0
    %1320 = vmatpush1.msra.mxu0 0.0
    %1321 = vmatprep.subr.mxu0 0.0
    %1322 = vmatpush1.msra.mxu0 0.0
    %1323 = vmatprep.subr.mxu0 0.0
    %1324 = vmatpush1.msra.mxu0 0.0
    %1325 = vmatprep.subr.mxu0 0.0
    %1326 = vmatpush1.msra.mxu0 0.0
    %1327 = vmatprep.subr.mxu0 0.0
    %1328 = vmatpush1.msra.mxu0 0.0
    %1329 = vmatprep.subr.mxu0 0.0
    %1330 = vmatpush1.msra.mxu0 0.0
    %1331 = vmatprep.subr.mxu0 0.0
    %1332 = vmatpush1.msra.mxu0 0.0
    %1333 = vmatprep.subr.mxu0 0.0
    %1334 = vmatpush1.msra.mxu0 0.0
    %1335 = vmatprep.subr.mxu0 0.0
    %1336 = vmatpush1.msra.mxu0 0.0
    %1337 = vmatprep.subr.mxu0 0.0
    %1338 = vmatpush1.msra.mxu0 0.0
    %1339 = vmatprep.subr.mxu0 0.0
    %1340 = vmatpush1.msra.mxu0 0.0
    %1341 = vmatprep.subr.mxu0 0.0
    %1342 = vmatpush1.msra.mxu0 0.0
    %1343 = vmatprep.subr.mxu0 0.0
    %1344 = vmatpush1.msra.mxu0 0.0
    %1345 = vmatprep.subr.mxu0 0.0
    %1346 = vmatpush1.msra.mxu0 0.0
    %1347 = vmatprep.subr.mxu0 0.0
    %1348 = vmatpush1.msra.mxu0 0.0
    %1349 = vmatprep.subr.mxu0 0.0
    %1350 = vmatpush1.msra.mxu0 0.0
    %1351 = vmatprep.subr.mxu0 0.0
    %1352 = vmatpush1.msra.mxu0 0.0
    %1353 = vmatprep.subr.mxu0 0.0
    %1354 = vmatpush1.msra.mxu0 0.0
    %1355 = vmatprep.subr.mxu0 0.0
    %1356 = vmatpush1.msra.mxu0 0.0
    %1357 = vmatprep.subr.mxu0 0.0
    %1358 = vmatpush1.msra.mxu0 0.0
    %1359 = vmatprep.subr.mxu0 0.0
    %1360 = vmatpush1.msra.mxu0 0.0
    %1361 = vmatprep.mubr.f32.mxu0 0.0
    %1362 = vmatmul.mubr.f32.gmra.mrb[0].mxu0 %v1295
    %v1363 = vpop.f32.mrb[0].mxu0
    %v1364 = vadd.f32 0.0, %v1363
    %v1365 = vpop.f32.mrb[0].mxu0
    %1366 = vdwg.mxu0
    %v1368 = vrot.slane %v1364, 3
    %v1370 = vadd.f32 %v150, %v1368
    %v1371 = vmul.f32 %v1370, 0.5
    %v1372 = vtanh.pop %v1371
    %v1373 = vadd.f32 %v1372, 1.0
    %v1374 = vmul.f32 %v1373, 0.5
    %v1375 = vtanh.pop %v1370
    %v1377 = vrot.slane %v1161, 7
    %v1379 = vmul.f32 %v1374, %v1377
    %1381 = vrot.lane.b32.xlu0 %v1375, 64
    %v1382 = vpop.permute.xlu0 %1381
    %v1384 = vmul.f32 %v1374, %v1382
    %1386 = vrot.lane.b32.xlu0 %v1384, 32
    %v1387 = vpop.permute.xlu0 %1386
    %v1389 = vadd.f32 %v1379, %v1387
    %v1390 = vtanh.pop %v1389
    %1392 = vrot.lane.b32.xlu0 %v1390, 64
    %v1393 = vpop.permute.xlu0 %1392
    %v1395 = vmul.f32 %v1374, %v1393
    %1397 = vrot.lane.b32.xlu0 %v1395, 32
    %v1398 = vpop.permute.xlu0 %1397
    %vm1400 = vcmask 259077
    %1401 = vst.msk [vmem:[#allocation2 - $0x5] sm:$0x20] %vm1400, %v1398
    %1402 = vrot.lane.b32.xlu0 %v1282, 64
    %v1403 = vpop.permute.xlu0 %1402
    %1405 = vst.msk [vmem:[#allocation2] sm:$0x1] %vm266, %v1403
    %v1406 = vld [vmem:[#allocation2] sm:$0x1]
    %v1407 = vld [vmem:[#allocation7] sm:$0xff]
    %v1408 = vld [vmem:[#allocation7 + $0x8] sm:$0xff]
    %v1409 = vld [vmem:[#allocation7 + $0x10] sm:$0xff]
    %v1410 = vld [vmem:[#allocation7 + $0x18] sm:$0xff]
    %v1411 = vld [vmem:[#allocation7 + $0x20] sm:$0xff]
    %v1412 = vld [vmem:[#allocation7 + $0x28] sm:$0xff]
    %v1413 = vld [vmem:[#allocation7 + $0x30] sm:$0xff]
    %v1414 = vld [vmem:[#allocation7 + $0x38] sm:$0xff]
    %v1415 = vld [vmem:[#allocation9 + $0x1] sm:$0x1]
    %v1417 = vsel %vm278, %v1406, 0
    %1419 = vmatprep.subr.mxu0 0.0
    %1420 = vmatpush1.msra.mxu0 %v1407
    %1421 = vmatprep.subr.mxu0 0.0
    %1422 = vmatpush1.msra.mxu0 %v1408
    %1423 = vmatprep.subr.mxu0 0.0
    %1424 = vmatpush1.msra.mxu0 %v1409
    %1425 = vmatprep.subr.mxu0 0.0
    %1426 = vmatpush1.msra.mxu0 %v1410
    %1427 = vmatprep.subr.mxu0 0.0
    %1428 = vmatpush1.msra.mxu0 %v1411
    %1429 = vmatprep.subr.mxu0 0.0
    %1430 = vmatpush1.msra.mxu0 %v1412
    %1431 = vmatprep.subr.mxu0 0.0
    %1432 = vmatpush1.msra.mxu0 %v1413
    %1433 = vmatprep.subr.mxu0 0.0
    %1434 = vmatpush1.msra.mxu0 %v1414
    %1435 = vmatprep.subr.mxu0 0.0
    %1436 = vmatpush1.msra.mxu0 0.0
    %1437 = vmatprep.subr.mxu0 0.0
    %1438 = vmatpush1.msra.mxu0 0.0
    %1439 = vmatprep.subr.mxu0 0.0
    %1440 = vmatpush1.msra.mxu0 0.0
    %1441 = vmatprep.subr.mxu0 0.0
    %1442 = vmatpush1.msra.mxu0 0.0
    %1443 = vmatprep.subr.mxu0 0.0
    %1444 = vmatpush1.msra.mxu0 0.0
    %1445 = vmatprep.subr.mxu0 0.0
    %1446 = vmatpush1.msra.mxu0 0.0
    %1447 = vmatprep.subr.mxu0 0.0
    %1448 = vmatpush1.msra.mxu0 0.0
    %1449 = vmatprep.subr.mxu0 0.0
    %1450 = vmatpush1.msra.mxu0 0.0
    %1451 = vmatprep.subr.mxu0 0.0
    %1452 = vmatpush1.msra.mxu0 0.0
    %1453 = vmatprep.subr.mxu0 0.0
    %1454 = vmatpush1.msra.mxu0 0.0
    %1455 = vmatprep.subr.mxu0 0.0
    %1456 = vmatpush1.msra.mxu0 0.0
    %1457 = vmatprep.subr.mxu0 0.0
    %1458 = vmatpush1.msra.mxu0 0.0
    %1459 = vmatprep.subr.mxu0 0.0
    %1460 = vmatpush1.msra.mxu0 0.0
    %1461 = vmatprep.subr.mxu0 0.0
    %1462 = vmatpush1.msra.mxu0 0.0
    %1463 = vmatprep.subr.mxu0 0.0
    %1464 = vmatpush1.msra.mxu0 0.0
    %1465 = vmatprep.subr.mxu0 0.0
    %1466 = vmatpush1.msra.mxu0 0.0
    %1467 = vmatprep.subr.mxu0 0.0
    %1468 = vmatpush1.msra.mxu0 0.0
    %1469 = vmatprep.subr.mxu0 0.0
    %1470 = vmatpush1.msra.mxu0 0.0
    %1471 = vmatprep.subr.mxu0 0.0
    %1472 = vmatpush1.msra.mxu0 0.0
    %1473 = vmatprep.subr.mxu0 0.0
    %1474 = vmatpush1.msra.mxu0 0.0
    %1475 = vmatprep.subr.mxu0 0.0
    %1476 = vmatpush1.msra.mxu0 0.0
    %1477 = vmatprep.subr.mxu0 0.0
    %1478 = vmatpush1.msra.mxu0 0.0
    %1479 = vmatprep.subr.mxu0 0.0
    %1480 = vmatpush1.msra.mxu0 0.0
    %1481 = vmatprep.subr.mxu0 0.0
    %1482 = vmatpush1.msra.mxu0 0.0
    %1483 = vmatprep.mubr.f32.mxu0 0.0
    %1484 = vmatmul.mubr.f32.gmra.mrb[0].mxu0 %v1417
    %v1485 = vpop.f32.mrb[0].mxu0
    %v1486 = vadd.f32 %v1415, %v1485
    %v1487 = vpop.f32.mrb[0].mxu0
    %1488 = vdwg.mxu0
    %v1489 = vmul.f32 %v1486, 0.5
    %v1490 = vtanh.pop %v1489
    %v1491 = vadd.f32 %v1490, 1.0
    %v1492 = vmul.f32 %v1491, 0.5
    %v1493 = vtanh.pop %v1486
    %v1494 = vmul.f32 %v1492, %v1276
    %1496 = vrot.lane.b32.xlu0 %v1493, 64
    %v1497 = vpop.permute.xlu0 %1496
    %v1499 = vmul.f32 %v1492, %v1497
    %1501 = vrot.lane.b32.xlu0 %v1499, 32
    %v1502 = vpop.permute.xlu0 %1501
    %v1504 = vadd.f32 %v1494, %v1502
    %v1505 = vtanh.pop %v1504
    %1507 = vrot.lane.b32.xlu0 %v1505, 64
    %v1508 = vpop.permute.xlu0 %1507
    %v1510 = vmul.f32 %v1492, %v1508
    %1512 = vrot.lane.b32.xlu0 %v1510, 32
    %v1513 = vpop.permute.xlu0 %1512
    %1515 = vst.msk [vmem:[#allocation3 + $0x5] sm:$0x1] %vm260, %v1513
    %v1516 = vld [vmem:[%s3] sm:$0xff]
    %v1517 = vld [vmem:[%s3 + $0x8] sm:$0xff]
    %v1518 = vld [vmem:[%s3 + $0x10] sm:$0xff]
    %v1519 = vld [vmem:[%s3 + $0x18] sm:$0xff]
    %v1520 = vrot.slane %v1395, 5
    %1521 = vrot.lane.b32.xlu0 %v1520, 32
    %v1522 = vpop.permute.xlu0 %1521
    %v1523 = vsel %vm159, %v1522, 0
    %1525 = vmatprep.subr.mxu0 0.0
    %1526 = vmatpush1.msra.mxu0 %v1516
    %1527 = vmatprep.subr.mxu0 0.0
    %1528 = vmatpush1.msra.mxu0 %v1517
    %1529 = vmatprep.subr.mxu0 0.0
    %1530 = vmatpush1.msra.mxu0 %v1518
    %1531 = vmatprep.subr.mxu0 0.0
    %1532 = vmatpush1.msra.mxu0 %v1519
    %1533 = vmatprep.subr.mxu0 0.0
    %1534 = vmatpush1.msra.mxu0 0.0
    %1535 = vmatprep.subr.mxu0 0.0
    %1536 = vmatpush1.msra.mxu0 0.0
    %1537 = vmatprep.subr.mxu0 0.0
    %1538 = vmatpush1.msra.mxu0 0.0
    %1539 = vmatprep.subr.mxu0 0.0
    %1540 = vmatpush1.msra.mxu0 0.0
    %1541 = vmatprep.subr.mxu0 0.0
    %1542 = vmatpush1.msra.mxu0 0.0
    %1543 = vmatprep.subr.mxu0 0.0
    %1544 = vmatpush1.msra.mxu0 0.0
    %1545 = vmatprep.subr.mxu0 0.0
    %1546 = vmatpush1.msra.mxu0 0.0
    %1547 = vmatprep.subr.mxu0 0.0
    %1548 = vmatpush1.msra.mxu0 0.0
    %1549 = vmatprep.subr.mxu0 0.0
    %1550 = vmatpush1.msra.mxu0 0.0
    %1551 = vmatprep.subr.mxu0 0.0
    %1552 = vmatpush1.msra.mxu0 0.0
    %1553 = vmatprep.subr.mxu0 0.0
    %1554 = vmatpush1.msra.mxu0 0.0
    %1555 = vmatprep.subr.mxu0 0.0
    %1556 = vmatpush1.msra.mxu0 0.0
    %1557 = vmatprep.subr.mxu0 0.0
    %1558 = vmatpush1.msra.mxu0 0.0
    %1559 = vmatprep.subr.mxu0 0.0
    %1560 = vmatpush1.msra.mxu0 0.0
    %1561 = vmatprep.subr.mxu0 0.0
    %1562 = vmatpush1.msra.mxu0 0.0
    %1563 = vmatprep.subr.mxu0 0.0
    %1564 = vmatpush1.msra.mxu0 0.0
    %1565 = vmatprep.subr.mxu0 0.0
    %1566 = vmatpush1.msra.mxu0 0.0
    %1567 = vmatprep.subr.mxu0 0.0
    %1568 = vmatpush1.msra.mxu0 0.0
    %1569 = vmatprep.subr.mxu0 0.0
    %1570 = vmatpush1.msra.mxu0 0.0
    %1571 = vmatprep.subr.mxu0 0.0
    %1572 = vmatpush1.msra.mxu0 0.0
    %1573 = vmatprep.subr.mxu0 0.0
    %1574 = vmatpush1.msra.mxu0 0.0
    %1575 = vmatprep.subr.mxu0 0.0
    %1576 = vmatpush1.msra.mxu0 0.0
    %1577 = vmatprep.subr.mxu0 0.0
    %1578 = vmatpush1.msra.mxu0 0.0
    %1579 = vmatprep.subr.mxu0 0.0
    %1580 = vmatpush1.msra.mxu0 0.0
    %1581 = vmatprep.subr.mxu0 0.0
    %1582 = vmatpush1.msra.mxu0 0.0
    %1583 = vmatprep.subr.mxu0 0.0
    %1584 = vmatpush1.msra.mxu0 0.0
    %1585 = vmatprep.subr.mxu0 0.0
    %1586 = vmatpush1.msra.mxu0 0.0
    %1587 = vmatprep.subr.mxu0 0.0
    %1588 = vmatpush1.msra.mxu0 0.0
    %1589 = vmatprep.mubr.f32.mxu0 0.0
    %1590 = vmatmul.mubr.f32.gmra.mrb[0].mxu0 %v1523
    %v1591 = vpop.f32.mrb[0].mxu0
    %v1592 = vadd.f32 0.0, %v1591
    %v1593 = vpop.f32.mrb[0].mxu0
    %1594 = vdwg.mxu0
    %v1596 = vrot.slane %v1592, 2
    %v1598 = vadd.f32 %v150, %v1596
    %v1599 = vmul.f32 %v1598, 0.5
    %v1600 = vtanh.pop %v1599
    %v1601 = vadd.f32 %v1600, 1.0
    %v1602 = vmul.f32 %v1601, 0.5
    %v1603 = vtanh.pop %v1598
    %v1605 = vrot.slane %v1389, 7
    %v1607 = vmul.f32 %v1602, %v1605
    %1609 = vrot.lane.b32.xlu0 %v1603, 64
    %v1610 = vpop.permute.xlu0 %1609
    %v1612 = vmul.f32 %v1602, %v1610
    %1614 = vrot.lane.b32.xlu0 %v1612, 32
    %v1615 = vpop.permute.xlu0 %1614
    %v1617 = vadd.f32 %v1607, %v1615
    %v1618 = vtanh.pop %v1617
    %1620 = vrot.lane.b32.xlu0 %v1618, 64
    %v1621 = vpop.permute.xlu0 %1620
    %v1623 = vmul.f32 %v1602, %v1621
    %1625 = vrot.lane.b32.xlu0 %v1623, 32
    %v1626 = vpop.permute.xlu0 %1625
    %vm1628 = vcmask 260102
    %1629 = vst.msk [vmem:[#allocation2 - $0x6] sm:$0x40] %vm1628, %v1626
    %1630 = vrot.lane.b32.xlu0 %v1510, 64
    %v1631 = vpop.permute.xlu0 %1630
    %1633 = vst.msk [vmem:[#allocation2] sm:$0x1] %vm266, %v1631
    %v1634 = vld [vmem:[#allocation2] sm:$0x1]
    %v1635 = vld [vmem:[#allocation7] sm:$0xff]
    %v1636 = vld [vmem:[#allocation7 + $0x8] sm:$0xff]
    %v1637 = vld [vmem:[#allocation7 + $0x10] sm:$0xff]
    %v1638 = vld [vmem:[#allocation7 + $0x18] sm:$0xff]
    %v1639 = vld [vmem:[#allocation7 + $0x20] sm:$0xff]
    %v1640 = vld [vmem:[#allocation7 + $0x28] sm:$0xff]
    %v1641 = vld [vmem:[#allocation7 + $0x30] sm:$0xff]
    %v1642 = vld [vmem:[#allocation7 + $0x38] sm:$0xff]
    %v1643 = vld [vmem:[#allocation9 + $0x1] sm:$0x1]
    %v1645 = vsel %vm278, %v1634, 0
    %1647 = vmatprep.subr.mxu0 0.0
    %1648 = vmatpush1.msra.mxu0 %v1635
    %1649 = vmatprep.subr.mxu0 0.0
    %1650 = vmatpush1.msra.mxu0 %v1636
    %1651 = vmatprep.subr.mxu0 0.0
    %1652 = vmatpush1.msra.mxu0 %v1637
    %1653 = vmatprep.subr.mxu0 0.0
    %1654 = vmatpush1.msra.mxu0 %v1638
    %1655 = vmatprep.subr.mxu0 0.0
    %1656 = vmatpush1.msra.mxu0 %v1639
    %1657 = vmatprep.subr.mxu0 0.0
    %1658 = vmatpush1.msra.mxu0 %v1640
    %1659 = vmatprep.subr.mxu0 0.0
    %1660 = vmatpush1.msra.mxu0 %v1641
    %1661 = vmatprep.subr.mxu0 0.0
    %1662 = vmatpush1.msra.mxu0 %v1642
    %1663 = vmatprep.subr.mxu0 0.0
    %1664 = vmatpush1.msra.mxu0 0.0
    %1665 = vmatprep.subr.mxu0 0.0
    %1666 = vmatpush1.msra.mxu0 0.0
    %1667 = vmatprep.subr.mxu0 0.0
    %1668 = vmatpush1.msra.mxu0 0.0
    %1669 = vmatprep.subr.mxu0 0.0
    %1670 = vmatpush1.msra.mxu0 0.0
    %1671 = vmatprep.subr.mxu0 0.0
    %1672 = vmatpush1.msra.mxu0 0.0
    %1673 = vmatprep.subr.mxu0 0.0
    %1674 = vmatpush1.msra.mxu0 0.0
    %1675 = vmatprep.subr.mxu0 0.0
    %1676 = vmatpush1.msra.mxu0 0.0
    %1677 = vmatprep.subr.mxu0 0.0
    %1678 = vmatpush1.msra.mxu0 0.0
    %1679 = vmatprep.subr.mxu0 0.0
    %1680 = vmatpush1.msra.mxu0 0.0
    %1681 = vmatprep.subr.mxu0 0.0
    %1682 = vmatpush1.msra.mxu0 0.0
    %1683 = vmatprep.subr.mxu0 0.0
    %1684 = vmatpush1.msra.mxu0 0.0
    %1685 = vmatprep.subr.mxu0 0.0
    %1686 = vmatpush1.msra.mxu0 0.0
    %1687 = vmatprep.subr.mxu0 0.0
    %1688 = vmatpush1.msra.mxu0 0.0
    %1689 = vmatprep.subr.mxu0 0.0
    %1690 = vmatpush1.msra.mxu0 0.0
    %1691 = vmatprep.subr.mxu0 0.0
    %1692 = vmatpush1.msra.mxu0 0.0
    %1693 = vmatprep.subr.mxu0 0.0
    %1694 = vmatpush1.msra.mxu0 0.0
    %1695 = vmatprep.subr.mxu0 0.0
    %1696 = vmatpush1.msra.mxu0 0.0
    %1697 = vmatprep.subr.mxu0 0.0
    %1698 = vmatpush1.msra.mxu0 0.0
    %1699 = vmatprep.subr.mxu0 0.0
    %1700 = vmatpush1.msra.mxu0 0.0
    %1701 = vmatprep.subr.mxu0 0.0
    %1702 = vmatpush1.msra.mxu0 0.0
    %1703 = vmatprep.subr.mxu0 0.0
    %1704 = vmatpush1.msra.mxu0 0.0
    %1705 = vmatprep.subr.mxu0 0.0
    %1706 = vmatpush1.msra.mxu0 0.0
    %1707 = vmatprep.subr.mxu0 0.0
    %1708 = vmatpush1.msra.mxu0 0.0
    %1709 = vmatprep.subr.mxu0 0.0
    %1710 = vmatpush1.msra.mxu0 0.0
    %1711 = vmatprep.mubr.f32.mxu0 0.0
    %1712 = vmatmul.mubr.f32.gmra.mrb[0].mxu0 %v1645
    %v1713 = vpop.f32.mrb[0].mxu0
    %v1714 = vadd.f32 %v1643, %v1713
    %v1715 = vpop.f32.mrb[0].mxu0
    %1716 = vdwg.mxu0
    %v1717 = vmul.f32 %v1714, 0.5
    %v1718 = vtanh.pop %v1717
    %v1719 = vadd.f32 %v1718, 1.0
    %v1720 = vmul.f32 %v1719, 0.5
    %v1721 = vtanh.pop %v1714
    %v1722 = vmul.f32 %v1720, %v1504
    %1724 = vrot.lane.b32.xlu0 %v1721, 64
    %v1725 = vpop.permute.xlu0 %1724
    %v1727 = vmul.f32 %v1720, %v1725
    %1729 = vrot.lane.b32.xlu0 %v1727, 32
    %v1730 = vpop.permute.xlu0 %1729
    %v1732 = vadd.f32 %v1722, %v1730
    %v1733 = vtanh.pop %v1732
    %1735 = vrot.lane.b32.xlu0 %v1733, 64
    %v1736 = vpop.permute.xlu0 %1735
    %v1738 = vmul.f32 %v1720, %v1736
    %1740 = vrot.lane.b32.xlu0 %v1738, 32
    %v1741 = vpop.permute.xlu0 %1740
    %1743 = vst.msk [vmem:[#allocation3 + $0x6] sm:$0x1] %vm260, %v1741
    %v1744 = vld [vmem:[%s3] sm:$0xff]
    %v1745 = vld [vmem:[%s3 + $0x8] sm:$0xff]
    %v1746 = vld [vmem:[%s3 + $0x10] sm:$0xff]
    %v1747 = vld [vmem:[%s3 + $0x18] sm:$0xff]
    %v1748 = vrot.slane %v1623, 6
    %1749 = vrot.lane.b32.xlu0 %v1748, 32
    %v1750 = vpop.permute.xlu0 %1749
    %v1751 = vsel %vm159, %v1750, 0
    %1753 = vmatprep.subr.mxu0 0.0
    %1754 = vmatpush1.msra.mxu0 %v1744
    %1755 = vmatprep.subr.mxu0 0.0
    %1756 = vmatpush1.msra.mxu0 %v1745
    %1757 = vmatprep.subr.mxu0 0.0
    %1758 = vmatpush1.msra.mxu0 %v1746
    %1759 = vmatprep.subr.mxu0 0.0
    %1760 = vmatpush1.msra.mxu0 %v1747
    %1761 = vmatprep.subr.mxu0 0.0
    %1762 = vmatpush1.msra.mxu0 0.0
    %1763 = vmatprep.subr.mxu0 0.0
    %1764 = vmatpush1.msra.mxu0 0.0
    %1765 = vmatprep.subr.mxu0 0.0
    %1766 = vmatpush1.msra.mxu0 0.0
    %1767 = vmatprep.subr.mxu0 0.0
    %1768 = vmatpush1.msra.mxu0 0.0
    %1769 = vmatprep.subr.mxu0 0.0
    %1770 = vmatpush1.msra.mxu0 0.0
    %1771 = vmatprep.subr.mxu0 0.0
    %1772 = vmatpush1.msra.mxu0 0.0
    %1773 = vmatprep.subr.mxu0 0.0
    %1774 = vmatpush1.msra.mxu0 0.0
    %1775 = vmatprep.subr.mxu0 0.0
    %1776 = vmatpush1.msra.mxu0 0.0
    %1777 = vmatprep.subr.mxu0 0.0
    %1778 = vmatpush1.msra.mxu0 0.0
    %1779 = vmatprep.subr.mxu0 0.0
    %1780 = vmatpush1.msra.mxu0 0.0
    %1781 = vmatprep.subr.mxu0 0.0
    %1782 = vmatpush1.msra.mxu0 0.0
    %1783 = vmatprep.subr.mxu0 0.0
    %1784 = vmatpush1.msra.mxu0 0.0
    %1785 = vmatprep.subr.mxu0 0.0
    %1786 = vmatpush1.msra.mxu0 0.0
    %1787 = vmatprep.subr.mxu0 0.0
    %1788 = vmatpush1.msra.mxu0 0.0
    %1789 = vmatprep.subr.mxu0 0.0
    %1790 = vmatpush1.msra.mxu0 0.0
    %1791 = vmatprep.subr.mxu0 0.0
    %1792 = vmatpush1.msra.mxu0 0.0
    %1793 = vmatprep.subr.mxu0 0.0
    %1794 = vmatpush1.msra.mxu0 0.0
    %1795 = vmatprep.subr.mxu0 0.0
    %1796 = vmatpush1.msra.mxu0 0.0
    %1797 = vmatprep.subr.mxu0 0.0
    %1798 = vmatpush1.msra.mxu0 0.0
    %1799 = vmatprep.subr.mxu0 0.0
    %1800 = vmatpush1.msra.mxu0 0.0
    %1801 = vmatprep.subr.mxu0 0.0
    %1802 = vmatpush1.msra.mxu0 0.0
    %1803 = vmatprep.subr.mxu0 0.0
    %1804 = vmatpush1.msra.mxu0 0.0
    %1805 = vmatprep.subr.mxu0 0.0
    %1806 = vmatpush1.msra.mxu0 0.0
    %1807 = vmatprep.subr.mxu0 0.0
    %1808 = vmatpush1.msra.mxu0 0.0
    %1809 = vmatprep.subr.mxu0 0.0
    %1810 = vmatpush1.msra.mxu0 0.0
    %1811 = vmatprep.subr.mxu0 0.0
    %1812 = vmatpush1.msra.mxu0 0.0
    %1813 = vmatprep.subr.mxu0 0.0
    %1814 = vmatpush1.msra.mxu0 0.0
    %1815 = vmatprep.subr.mxu0 0.0
    %1816 = vmatpush1.msra.mxu0 0.0
    %1817 = vmatprep.mubr.f32.mxu0 0.0
    %1818 = vmatmul.mubr.f32.gmra.mrb[0].mxu0 %v1751
    %v1819 = vpop.f32.mrb[0].mxu0
    %v1820 = vadd.f32 0.0, %v1819
    %v1821 = vpop.f32.mrb[0].mxu0
    %1822 = vdwg.mxu0
    %v1824 = vrot.slane %v1820, 1
    %v1826 = vadd.f32 %v150, %v1824
    %v1827 = vmul.f32 %v1826, 0.5
    %v1828 = vtanh.pop %v1827
    %v1829 = vadd.f32 %v1828, 1.0
    %v1830 = vmul.f32 %v1829, 0.5
    %v1831 = vtanh.pop %v1826
    %v1833 = vrot.slane %v1617, 7
    %v1835 = vmul.f32 %v1830, %v1833
    %1837 = vrot.lane.b32.xlu0 %v1831, 64
    %v1838 = vpop.permute.xlu0 %1837
    %v1840 = vmul.f32 %v1830, %v1838
    %1842 = vrot.lane.b32.xlu0 %v1840, 32
    %v1843 = vpop.permute.xlu0 %1842
    %v1845 = vadd.f32 %v1835, %v1843
    %v1846 = vtanh.pop %v1845
    %1848 = vrot.lane.b32.xlu0 %v1846, 64
    %v1849 = vpop.permute.xlu0 %1848
    %v1851 = vmul.f32 %v1830, %v1849
    %1853 = vrot.lane.b32.xlu0 %v1851, 32
    %v1854 = vpop.permute.xlu0 %1853
    %vm1856 = vcmask 261127
    %1857 = vst.msk [vmem:[#allocation2 - $0x7] sm:$0x80] %vm1856, %v1854
    %1858 = vrot.lane.b32.xlu0 %v1738, 64
    %v1859 = vpop.permute.xlu0 %1858
    %1861 = vst.msk [vmem:[#allocation2] sm:$0x1] %vm266, %v1859
    %v1862 = vld [vmem:[#allocation2] sm:$0x1]
    %v1863 = vld [vmem:[#allocation7] sm:$0xff]
    %v1864 = vld [vmem:[#allocation7 + $0x8] sm:$0xff]
    %v1865 = vld [vmem:[#allocation7 + $0x10] sm:$0xff]
    %v1866 = vld [vmem:[#allocation7 + $0x18] sm:$0xff]
    %v1867 = vld [vmem:[#allocation7 + $0x20] sm:$0xff]
    %v1868 = vld [vmem:[#allocation7 + $0x28] sm:$0xff]
    %v1869 = vld [vmem:[#allocation7 + $0x30] sm:$0xff]
    %v1870 = vld [vmem:[#allocation7 + $0x38] sm:$0xff]
    %v1871 = vld [vmem:[#allocation9 + $0x1] sm:$0x1]
    %v1873 = vsel %vm278, %v1862, 0
    %1875 = vmatprep.subr.mxu0 0.0
    %1876 = vmatpush1.msra.mxu0 %v1863
    %1877 = vmatprep.subr.mxu0 0.0
    %1878 = vmatpush1.msra.mxu0 %v1864
    %1879 = vmatprep.subr.mxu0 0.0
    %1880 = vmatpush1.msra.mxu0 %v1865
    %1881 = vmatprep.subr.mxu0 0.0
    %1882 = vmatpush1.msra.mxu0 %v1866
    %1883 = vmatprep.subr.mxu0 0.0
    %1884 = vmatpush1.msra.mxu0 %v1867
    %1885 = vmatprep.subr.mxu0 0.0
    %1886 = vmatpush1.msra.mxu0 %v1868
    %1887 = vmatprep.subr.mxu0 0.0
    %1888 = vmatpush1.msra.mxu0 %v1869
    %1889 = vmatprep.subr.mxu0 0.0
    %1890 = vmatpush1.msra.mxu0 %v1870
    %1891 = vmatprep.subr.mxu0 0.0
    %1892 = vmatpush1.msra.mxu0 0.0
    %1893 = vmatprep.subr.mxu0 0.0
    %1894 = vmatpush1.msra.mxu0 0.0
    %1895 = vmatprep.subr.mxu0 0.0
    %1896 = vmatpush1.msra.mxu0 0.0
    %1897 = vmatprep.subr.mxu0 0.0
    %1898 = vmatpush1.msra.mxu0 0.0
    %1899 = vmatprep.subr.mxu0 0.0
    %1900 = vmatpush1.msra.mxu0 0.0
    %1901 = vmatprep.subr.mxu0 0.0
    %1902 = vmatpush1.msra.mxu0 0.0
    %1903 = vmatprep.subr.mxu0 0.0
    %1904 = vmatpush1.msra.mxu0 0.0
    %1905 = vmatprep.subr.mxu0 0.0
    %1906 = vmatpush1.msra.mxu0 0.0
    %1907 = vmatprep.subr.mxu0 0.0
    %1908 = vmatpush1.msra.mxu0 0.0
    %1909 = vmatprep.subr.mxu0 0.0
    %1910 = vmatpush1.msra.mxu0 0.0
    %1911 = vmatprep.subr.mxu0 0.0
    %1912 = vmatpush1.msra.mxu0 0.0
    %1913 = vmatprep.subr.mxu0 0.0
    %1914 = vmatpush1.msra.mxu0 0.0
    %1915 = vmatprep.subr.mxu0 0.0
    %1916 = vmatpush1.msra.mxu0 0.0
    %1917 = vmatprep.subr.mxu0 0.0
    %1918 = vmatpush1.msra.mxu0 0.0
    %1919 = vmatprep.subr.mxu0 0.0
    %1920 = vmatpush1.msra.mxu0 0.0
    %1921 = vmatprep.subr.mxu0 0.0
    %1922 = vmatpush1.msra.mxu0 0.0
    %1923 = vmatprep.subr.mxu0 0.0
    %1924 = vmatpush1.msra.mxu0 0.0
    %1925 = vmatprep.subr.mxu0 0.0
    %1926 = vmatpush1.msra.mxu0 0.0
    %1927 = vmatprep.subr.mxu0 0.0
    %1928 = vmatpush1.msra.mxu0 0.0
    %1929 = vmatprep.subr.mxu0 0.0
    %1930 = vmatpush1.msra.mxu0 0.0
    %1931 = vmatprep.subr.mxu0 0.0
    %1932 = vmatpush1.msra.mxu0 0.0
    %1933 = vmatprep.subr.mxu0 0.0
    %1934 = vmatpush1.msra.mxu0 0.0
    %1935 = vmatprep.subr.mxu0 0.0
    %1936 = vmatpush1.msra.mxu0 0.0
    %1937 = vmatprep.subr.mxu0 0.0
    %1938 = vmatpush1.msra.mxu0 0.0
    %1939 = vmatprep.mubr.f32.mxu0 0.0
    %1940 = vmatmul.mubr.f32.gmra.mrb[0].mxu0 %v1873
    %v1941 = vpop.f32.mrb[0].mxu0
    %v1942 = vadd.f32 %v1871, %v1941
    %v1943 = vpop.f32.mrb[0].mxu0
    %1944 = vdwg.mxu0
    %v1945 = vmul.f32 %v1942, 0.5
    %v1946 = vtanh.pop %v1945
    %v1947 = vadd.f32 %v1946, 1.0
    %v1948 = vmul.f32 %v1947, 0.5
    %v1949 = vtanh.pop %v1942
    %v1950 = vmul.f32 %v1948, %v1732
    %1952 = vrot.lane.b32.xlu0 %v1949, 64
    %v1953 = vpop.permute.xlu0 %1952
    %v1955 = vmul.f32 %v1948, %v1953
    %1957 = vrot.lane.b32.xlu0 %v1955, 32
    %v1958 = vpop.permute.xlu0 %1957
    %v1960 = vadd.f32 %v1950, %v1958
    %v1961 = vtanh.pop %v1960
    %1963 = vrot.lane.b32.xlu0 %v1961, 64
    %v1964 = vpop.permute.xlu0 %1963
    %v1966 = vmul.f32 %v1948, %v1964
    %1968 = vrot.lane.b32.xlu0 %v1966, 32
    %v1969 = vpop.permute.xlu0 %1968
    %1971 = vst.msk [vmem:[#allocation3 + $0x7] sm:$0x1] %vm260, %v1969
    %v1972 = vld [vmem:[#allocation3] sm:$0xff]
    %v1973 = vld [vmem:[%s6] sm:$0xff]
    %v1974 = vld [vmem:[%s6 + $0x8] sm:$0xff]
    %v1975 = vld [vmem:[%s6 + $0x10] sm:$0xff]
    %v1976 = vld [vmem:[%s6 + $0x18] sm:$0xff]
    %v1977 = vld [vmem:[%s7] sm:$0x1]
    %v1979 = vlaneseq
    %v1980 = vshrl.u32 %v1979, 7
    %v1981 = vsub.s32 0, %v1980
    %v1982 = vrot.slane %v1977, %v1981
    %v1985 = vsel %vm159, %v1972, 0
    %1987 = vmatprep.subr.mxu0 0.0
    %1988 = vmatpush1.msra.mxu0 %v1973
    %1989 = vmatprep.subr.mxu0 0.0
    %1990 = vmatpush1.msra.mxu0 %v1974
    %1991 = vmatprep.subr.mxu0 0.0
    %1992 = vmatpush1.msra.mxu0 %v1975
    %1993 = vmatprep.subr.mxu0 0.0
    %1994 = vmatpush1.msra.mxu0 %v1976
    %1995 = vmatprep.subr.mxu0 0.0
    %1996 = vmatpush1.msra.mxu0 0.0
    %1997 = vmatprep.subr.mxu0 0.0
    %1998 = vmatpush1.msra.mxu0 0.0
    %1999 = vmatprep.subr.mxu0 0.0
    %2000 = vmatpush1.msra.mxu0 0.0
    %2001 = vmatprep.subr.mxu0 0.0
    %2002 = vmatpush1.msra.mxu0 0.0
    %2003 = vmatprep.subr.mxu0 0.0
    %2004 = vmatpush1.msra.mxu0 0.0
    %2005 = vmatprep.subr.mxu0 0.0
    %2006 = vmatpush1.msra.mxu0 0.0
    %2007 = vmatprep.subr.mxu0 0.0
    %2008 = vmatpush1.msra.mxu0 0.0
    %2009 = vmatprep.subr.mxu0 0.0
    %2010 = vmatpush1.msra.mxu0 0.0
    %2011 = vmatprep.subr.mxu0 0.0
    %2012 = vmatpush1.msra.mxu0 0.0
    %2013 = vmatprep.subr.mxu0 0.0
    %2014 = vmatpush1.msra.mxu0 0.0
    %2015 = vmatprep.subr.mxu0 0.0
    %2016 = vmatpush1.msra.mxu0 0.0
    %2017 = vmatprep.subr.mxu0 0.0
    %2018 = vmatpush1.msra.mxu0 0.0
    %2019 = vmatprep.subr.mxu0 0.0
    %2020 = vmatpush1.msra.mxu0 0.0
    %2021 = vmatprep.subr.mxu0 0.0
    %2022 = vmatpush1.msra.mxu0 0.0
    %2023 = vmatprep.subr.mxu0 0.0
    %2024 = vmatpush1.msra.mxu0 0.0
    %2025 = vmatprep.subr.mxu0 0.0
    %2026 = vmatpush1.msra.mxu0 0.0
    %2027 = vmatprep.subr.mxu0 0.0
    %2028 = vmatpush1.msra.mxu0 0.0
    %2029 = vmatprep.subr.mxu0 0.0
    %2030 = vmatpush1.msra.mxu0 0.0
    %2031 = vmatprep.subr.mxu0 0.0
    %2032 = vmatpush1.msra.mxu0 0.0
    %2033 = vmatprep.subr.mxu0 0.0
    %2034 = vmatpush1.msra.mxu0 0.0
    %2035 = vmatprep.subr.mxu0 0.0
    %2036 = vmatpush1.msra.mxu0 0.0
    %2037 = vmatprep.subr.mxu0 0.0
    %2038 = vmatpush1.msra.mxu0 0.0
    %2039 = vmatprep.subr.mxu0 0.0
    %2040 = vmatpush1.msra.mxu0 0.0
    %2041 = vmatprep.subr.mxu0 0.0
    %2042 = vmatpush1.msra.mxu0 0.0
    %2043 = vmatprep.subr.mxu0 0.0
    %2044 = vmatpush1.msra.mxu0 0.0
    %2045 = vmatprep.subr.mxu0 0.0
    %2046 = vmatpush1.msra.mxu0 0.0
    %2047 = vmatprep.subr.mxu0 0.0
    %2048 = vmatpush1.msra.mxu0 0.0
    %2049 = vmatprep.subr.mxu0 0.0
    %2050 = vmatpush1.msra.mxu0 0.0
    %2051 = vmatprep.mubr.f32.mxu0 0.0
    %2052 = vmatmul.mubr.f32.gmra.mrb[0].mxu0 %v1985
    %v2053 = vpop.f32.mrb[0].mxu0
    %v2054 = vadd.f32 %v1982, %v2053
    %v2055 = vpop.f32.mrb[0].mxu0
    %2056 = vdwg.mxu0
    %vm2057 = vcmask 64512
    %2058 = vst.msk [vmem:[#allocation10] sm:$0xff] %vm2057, %v2054
    %2059 = vst.msk [vmem:[#allocation11 - $0x7] sm:$0x80] %vm1856, %v1854
    %2061 = vrot.lane.b32.xlu0 %v1845, 96
    %v2062 = vpop.permute.xlu0 %2061
    %2064 = vst.msk [vmem:[#allocation13 - $0x7] sm:$0x80] %vm1856, %v2062
    %2065 = vst.msk [vmem:[#allocation11 + $0x1] sm:$0x1] %vm260, %v1969
    %2067 = vrot.lane.b32.xlu0 %v1960, 96
    %v2068 = vpop.permute.xlu0 %2067
    %2070 = vst.msk [vmem:[#allocation13 + $0x1] sm:$0x1] %vm260, %v2068
    // Predicated region
    $region46: #{decoder_forward.1} parent=1 // pred_check
      _
    $region47: #{decoder_forward.1} parent=1 // pred_check_branch
      %2072 = sbr.rel (0) target = $region49
    $region48: #{decoder_forward.1} parent=1 // pred_region
      %s2074 = ssub.s32 128, 128
      %2075 = vsyncadd [#allocation6], %s2074
      %s2077 = sshll.u32 [#allocation10], 4
      %s2078 = int_to_ptr.vmem [resolvable:$true] %s2077
      %2080 = dma.vmem_to_hbm [thread:$0]  %s2078, 128, %s8, [#allocation6]
    $region49: #{decoder_forward.1} parent=1 // pred_fallthru
      _
    // Predicated region
    $region50: #{decoder_forward.1} parent=1 // pred_check
      _
    $region51: #{decoder_forward.1} parent=1 // pred_check_branch
      %2082 = sbr.rel (0) target = $region53
    $region52: #{decoder_forward.1} parent=1 // pred_region
      %s2084 = ssub.s32 32, 32
      %2085 = vsyncadd [#allocation12], %s2084
      %s2087 = sshll.u32 [#allocation11], 4
      %s2088 = int_to_ptr.vmem [resolvable:$true] %s2087
      %2090 = dma.vmem_to_hbm [thread:$0]  %s2088, 32, %s9, [#allocation12]
    $region53: #{decoder_forward.1} parent=1 // pred_fallthru
      _
    // Predicated region
    $region54: #{decoder_forward.1} parent=1 // pred_check
      _
    $region55: #{decoder_forward.1} parent=1 // pred_check_branch
      %2092 = sbr.rel (0) target = $region57
    $region56: #{decoder_forward.1} parent=1 // pred_region
      %s2094 = ssub.s32 32, 32
      %2095 = vsyncadd [#allocation12], %s2094
      %s2097 = sshll.u32 [#allocation13], 4
      %s2098 = int_to_ptr.vmem [resolvable:$true] %s2097
      %2100 = dma.vmem_to_hbm [thread:$0]  %s2098, 32, %s10, [#allocation12]
    $region57: #{decoder_forward.1} parent=1 // pred_fallthru
      _
    // Predicated region
    $region58: #{decoder_forward.1} parent=1 // pred_check
      _
    $region59: #{decoder_forward.1} parent=1 // pred_check_branch
      %2102 = sbr.rel (0) target = $region61
    $region60: #{decoder_forward.1} parent=1 // pred_region
      %2103 = dma.done [#allocation6], 128
    $region61: #{decoder_forward.1} parent=1 // pred_fallthru
      _
    // Predicated region
    $region62: #{decoder_forward.1} parent=1 // pred_check
      _
    $region63: #{decoder_forward.1} parent=1 // pred_check_branch
      %2105 = sbr.rel (0) target = $region65
    $region64: #{decoder_forward.1} parent=1 // pred_region
      %2106 = dma.done [#allocation12], 32
    $region65: #{decoder_forward.1} parent=1 // pred_fallthru
      _
    // Predicated region
    $region66: #{decoder_forward.1} parent=1 // pred_check
      _
    $region67: #{decoder_forward.1} parent=1 // pred_check_branch
      %2108 = sbr.rel (0) target = $region69
    $region68: #{decoder_forward.1} parent=1 // pred_region
      %2109 = dma.done [#allocation12], 32
    $region69: #{decoder_forward.1} parent=1 // pred_fallthru
      _
    %2110 = vsyncpa [#allocation5], 1
    %2111 = vsyncpa [#allocation8], 1
    %2112 = vsyncpa [#allocation6], 1
    %2113 = vsyncpa [#allocation12], 1

</llo_original>
